<compile_context>
chip_gen: v7x
topology: tpu7x:2x2x1
jax: 0.10.0
libtpu: 0.0.40
codegen_flags: <defaults>
</compile_context>

<pallas_src>
import functools

import jax
import jax.numpy as jnp
from jax.experimental import pallas as pl
from jax.experimental.pallas import tpu as pltpu

PAD = 128  # lane-dense feature slab width


# ----------------------------------------------------------------------------
# Fused whole-network kernel (single grid step)
# ----------------------------------------------------------------------------
def _hcl_fused_kernel(adj_ref, x0_ref,
                      wqkv_ref, bqkv_ref, wo_ref, bo_ref,
                      w1_ref, b1_ref, w2_ref, b2_ref,
                      lng_ref, lnb_ref,
                      c1w_ref, c1b_ref, c2w_ref, c2b_ref,
                      out_ref, fe_ref,
                      *, d_true, n_layers, pad):
    f32 = jnp.float32
    bf16 = jnp.bfloat16

    adj = adj_ref[...]                       # bf16 [N, N], loaded once for all layers

    def gconv(xin, w, b):
        # DGL GraphConv ("both" norm baked into adj): A_norm @ (X W) + b
        xw = jnp.dot(xin.astype(bf16), w, preferred_element_type=f32)
        return jnp.dot(adj, xw.astype(bf16), preferred_element_type=f32) + b

    def layernorm(z, g, bb):
        # Padded lanes of z are zero, so single-pass moments over the padded axis equal
        # the true-feature moments when divided by d_true; gamma/beta are zero in padded
        # lanes so the output stays zero-padded.
        inv_d = 1.0 / d_true
        mu = jnp.sum(z, axis=-1, keepdims=True) * inv_d
        var = jnp.sum(z * z, axis=-1, keepdims=True) * inv_d - mu * mu
        return (z - mu) * jax.lax.rsqrt(var + 1e-5) * g + bb

    x = x0_ref[...]                          # f32 [N, pad]
    h_attn = None                            # post-softmax attention from previous layer

    for l in range(n_layers):                # n_layers is a compile-time constant
        g_ = lng_ref[l]                      # [1, pad]
        b_ = lnb_ref[l]

        # --- Self_Attention -------------------------------------------------
        # Fused Q/K/V graphconv, reassociated: (adj @ x) @ Wqkv keeps the NxN matmul
        # 128 lanes wide (vs 384 for adj @ (x @ Wqkv)).
        ax = jnp.dot(adj, x.astype(bf16), preferred_element_type=f32)          # [N, pad]
        qkv = jnp.dot(ax.astype(bf16), wqkv_ref[l],
                      preferred_element_type=f32) + bqkv_ref[l]                # [N, 3*pad]
        q = qkv[:, 0:pad]                    # 1/sqrt(d_k) already folded into Wq
        k = qkv[:, pad:2 * pad]
        v = qkv[:, 2 * pad:3 * pad]

        # scores = (Q / sqrt(d_k)) K^T  (+ previous layer's attention as h_attn bias)
        s = jax.lax.dot_general(q.astype(bf16), k.astype(bf16),
                                (((1,), (1,)), ((), ())),
                                preferred_element_type=f32)                    # [N, N]
        if h_attn is not None:
            s = s + h_attn.astype(f32)
        m = jnp.max(s, axis=-1, keepdims=True)
        e = jnp.exp(s - m)
        attn = e * pl.reciprocal(jnp.sum(e, axis=-1, keepdims=True), approx=True)

        ao = jnp.dot(attn.astype(bf16), v.astype(bf16),
                     preferred_element_type=f32)                               # [N, pad]
        ao = gconv(ao, wo_ref[l], bo_ref[l])                                   # W_O graphconv

        # --- HCLLayer epilogue: LN, residual, GCN feedforward, LN (same ln twice) ----
        ff_in = layernorm(ao, g_, b_) + x                    # dropout = identity (eval)
        h = jnp.maximum(gconv(ff_in, w1_ref[l], b1_ref[l]), 0.0)
        h = gconv(h, w2_ref[l], b2_ref[l])
        x = layernorm(h, g_, b_)

        # carry post-softmax attention to the next layer; bf16 halves the N^2 footprint
        h_attn = attn.astype(bf16)

    # --- classifier head -----------------------------------------------------
    fe = jnp.maximum(
        jnp.dot(x.astype(bf16), c1w_ref[...], preferred_element_type=f32) + c1b_ref[...],
        0.0)
    out = jnp.dot(fe.astype(bf16), c2w_ref[...], preferred_element_type=f32) + c2b_ref[...]
    fe_ref[...] = fe
    out_ref[...] = out


def hcl_forward(adj, node_emb, params, *, in_feats, n_layers, num_class, pad=PAD):
    n = node_emb.shape[0]
    x0 = jnp.zeros((n, pad), jnp.float32).at[:, :in_feats].set(node_emb)
    adj_bf16 = adj.astype(jnp.bfloat16)

    kernel = functools.partial(_hcl_fused_kernel, d_true=float(in_feats),
                               n_layers=n_layers, pad=pad)

    # No grid: every operand is a whole-array VMEM-resident ref; layer loop is in-kernel.
    out_pad, fe = pl.pallas_call(
        kernel,
        out_shape=(
            jax.ShapeDtypeStruct((n, 128), jnp.float32),   # logits (classes padded to 128)
            jax.ShapeDtypeStruct((n, 128), jnp.float32),   # fe (cla1 output is exactly 128)
        ),
        compiler_params=pltpu.CompilerParams(
            # raise v5e's 16 MiB default; safe on all generations.  Re-derive (and add
            # headroom for the N^2 adj / attention / softmax temporaries) for large N.
            vmem_limit_bytes=32 * 1024 * 1024,
        ),
    )(adj_bf16, x0,
      params["wqkv"], params["bqkv"], params["wo"], params["bo"],
      params["w1"], params["b1"], params["w2"], params["b2"],
      params["ln_g"], params["ln_b"],
      params["c1w"], params["c1b"], params["c2w"], params["c2b"])

    return out_pad[:, :num_class], fe


# ----------------------------------------------------------------------------
# Parameter init (deterministic, synthetic) -- padded, stacked, bf16 MXU weights
# ----------------------------------------------------------------------------
def _pad_to(a, shape):
    out = jnp.zeros(shape, a.dtype)
    return out.at[tuple(slice(0, s) for s in a.shape)].set(a)


def init_params(key, n_layers, in_feats, d_k, d_v, hidden_size, num_class, pad=PAD):
    assert max(in_feats, d_k, d_v, hidden_size, num_class) <= pad, \
        "feature dims must fit one 128-lane slab (extend with lane tiling otherwise)"
    scale_q = 1.0 / float(d_k) ** 0.5
    wqkv, bqkv, wo, bo, w1, b1, w2, b2, lng, lnb = ([] for _ in range(10))
    for _ in range(n_layers):
        key, *ks = jax.random.split(key, 8)
        wq = jax.random.normal(ks[0], (in_feats, d_k), jnp.float32) * 0.1
        wk = jax.random.normal(ks[1], (in_feats, d_k), jnp.float32) * 0.1
        wv = jax.random.normal(ks[2], (in_feats, d_v), jnp.float32) * 0.1
        wo_ = jax.random.normal(ks[3], (d_v, in_feats), jnp.float32) * 0.1
        w1_ = jax.random.normal(ks[4], (in_feats, hidden_size), jnp.float32) * 0.1
        w2_ = jax.random.normal(ks[5], (hidden_size, in_feats), jnp.float32) * 0.1
        # concatenated Q|K|V weight; fold 1/sqrt(d_k) into the Q projection
        qkv_w = jnp.zeros((pad, 3 * pad), jnp.float32)
        qkv_w = qkv_w.at[:in_feats, 0:d_k].set(wq * scale_q)
        qkv_w = qkv_w.at[:in_feats, pad:pad + d_k].set(wk)
        qkv_w = qkv_w.at[:in_feats, 2 * pad:2 * pad + d_v].set(wv)
        wqkv.append(qkv_w)
        bqkv.append(jnp.zeros((1, 3 * pad), jnp.float32))
        wo.append(_pad_to(wo_, (pad, pad)))
        bo.append(jnp.zeros((1, pad), jnp.float32))
        w1.append(_pad_to(w1_, (pad, pad)))
        b1.append(jnp.zeros((1, pad), jnp.float32))
        w2.append(_pad_to(w2_, (pad, pad)))
        b2.append(jnp.zeros((1, pad), jnp.float32))
        lng.append(_pad_to(jnp.ones((1, in_feats), jnp.float32), (1, pad)))
        lnb.append(jnp.zeros((1, pad), jnp.float32))
    k1, k2 = jax.random.split(key)
    c1w = _pad_to(jax.random.normal(k1, (in_feats, 128), jnp.float32) * 0.1, (pad, 128))
    c2w = _pad_to(jax.random.normal(k2, (128, num_class), jnp.float32) * 0.1, (128, 128))
    stack = lambda xs: jnp.stack(xs, axis=0)
    return {
        "wqkv": stack(wqkv).astype(jnp.bfloat16),
        "bqkv": stack(bqkv),
        "wo": stack(wo).astype(jnp.bfloat16),
        "bo": stack(bo),
        "w1": stack(w1).astype(jnp.bfloat16),
        "b1": stack(b1),
        "w2": stack(w2).astype(jnp.bfloat16),
        "b2": stack(b2),
        "ln_g": stack(lng),
        "ln_b": stack(lnb),
        "c1w": c1w.astype(jnp.bfloat16),
        "c1b": jnp.zeros((1, 128), jnp.float32),
        "c2w": c2w.astype(jnp.bfloat16),
        "c2b": jnp.zeros((1, 128), jnp.float32),
    }


def make_normalized_adj(n):
    # deterministic undirected ring graph; DGL GraphConv "both" norm: D^-1/2 A D^-1/2
    a = jnp.zeros((n, n), jnp.float32)
    idx = jnp.arange(n)
    a = a.at[idx, (idx + 1) % n].set(1.0)
    a = a.at[(idx + 1) % n, idx].set(1.0)
    deg = jnp.clip(jnp.sum(a, axis=1), 1.0, None)
    dinv = 1.0 / jnp.sqrt(deg)
    return a * dinv[:, None] * dinv[None, :]


# ----------------------------------------------------------------------------
if __name__ == "__main__":
    n_layers = 2
    n_nodes = 16
    in_feats = 32
    d_k = 16
    d_v = 16
    hidden_size = 32
    num_class = 4

    key = jax.random.PRNGKey(0)
    k_param, k_x = jax.random.split(key)
    params = init_params(k_param, n_layers, in_feats, d_k, d_v, hidden_size, num_class)
    node_emb = jax.random.normal(k_x, (n_nodes, in_feats), jnp.float32)
    adj = make_normalized_adj(n_nodes)

    fwd = jax.jit(functools.partial(hcl_forward, in_feats=in_feats,
                                    n_layers=n_layers, num_class=num_class))
    out, fe = fwd(adj, node_emb, params)
    jax.block_until_ready((out, fe))
    assert out.shape == (n_nodes, num_class) and fe.shape == (n_nodes, 128)
    print("KERNEL_OK")
</pallas_src>

<mosaic_0001>
module attributes {stable_mosaic.version = 11 : i64} {
  func.func @_hcl_fused_kernel(%arg0: memref<16x16xbf16, #tpu.memory_space<vmem>>, %arg1: memref<16x128xf32, #tpu.memory_space<vmem>>, %arg2: memref<2x128x384xbf16, #tpu.memory_space<vmem>>, %arg3: memref<2x1x384xf32, #tpu.memory_space<vmem>>, %arg4: memref<2x128x128xbf16, #tpu.memory_space<vmem>>, %arg5: memref<2x1x128xf32, #tpu.memory_space<vmem>>, %arg6: memref<2x128x128xbf16, #tpu.memory_space<vmem>>, %arg7: memref<2x1x128xf32, #tpu.memory_space<vmem>>, %arg8: memref<2x128x128xbf16, #tpu.memory_space<vmem>>, %arg9: memref<2x1x128xf32, #tpu.memory_space<vmem>>, %arg10: memref<2x1x128xf32, #tpu.memory_space<vmem>>, %arg11: memref<2x1x128xf32, #tpu.memory_space<vmem>>, %arg12: memref<128x128xbf16, #tpu.memory_space<vmem>>, %arg13: memref<1x128xf32, #tpu.memory_space<vmem>>, %arg14: memref<128x128xbf16, #tpu.memory_space<vmem>>, %arg15: memref<1x128xf32, #tpu.memory_space<vmem>>, %arg16: memref<16x128xf32, #tpu.memory_space<vmem>>, %arg17: memref<16x128xf32, #tpu.memory_space<vmem>>) attributes {dimension_semantics = [], scalar_prefetch = 0 : i64, scratch_operands = 0 : i64, tpu.core_type = #tpu.core_type<tc>} {
    %c0 = arith.constant 0 : index
    %c0_0 = arith.constant 0 : index
    %0 = vector.load %arg0[%c0, %c0_0] : memref<16x16xbf16, #tpu.memory_space<vmem>>, vector<16x16xbf16>
    %c0_1 = arith.constant 0 : index
    %c0_2 = arith.constant 0 : index
    %1 = vector.load %arg1[%c0_1, %c0_2] : memref<16x128xf32, #tpu.memory_space<vmem>>, vector<16x128xf32>
    %c0_3 = arith.constant 0 : index
    %c0_4 = arith.constant 0 : index
    %c0_5 = arith.constant 0 : index
    %2 = vector.load %arg10[%c0_3, %c0_4, %c0_5] : memref<2x1x128xf32, #tpu.memory_space<vmem>>, vector<1x1x128xf32>
    %3 = vector.shape_cast %2 : vector<1x1x128xf32> to vector<1x128xf32>
    %c0_6 = arith.constant 0 : index
    %c0_7 = arith.constant 0 : index
    %c0_8 = arith.constant 0 : index
    %4 = vector.load %arg11[%c0_6, %c0_7, %c0_8] : memref<2x1x128xf32, #tpu.memory_space<vmem>>, vector<1x1x128xf32>
    %5 = vector.shape_cast %4 : vector<1x1x128xf32> to vector<1x128xf32>
    %6 = arith.truncf %1 : vector<16x128xf32> to vector<16x128xbf16>
    %cst = arith.constant dense<0.000000e+00> : vector<16x128xf32>
    %7 = tpu.matmul %0, %6, %cst {dimension_numbers = #tpu.dot_dimension_numbers<[1], [0], [0], [1], [0, 0, 1, 1], [], []>} : vector<16x16xbf16>, vector<16x128xbf16>, vector<16x128xf32> -> vector<16x128xf32>
    %8 = arith.truncf %7 : vector<16x128xf32> to vector<16x128xbf16>
    %c0_9 = arith.constant 0 : index
    %c0_10 = arith.constant 0 : index
    %c0_11 = arith.constant 0 : index
    %9 = vector.load %arg2[%c0_9, %c0_10, %c0_11] : memref<2x128x384xbf16, #tpu.memory_space<vmem>>, vector<1x128x384xbf16>
    %10 = vector.shape_cast %9 : vector<1x128x384xbf16> to vector<128x384xbf16>
    %cst_12 = arith.constant dense<0.000000e+00> : vector<16x384xf32>
    %11 = tpu.matmul %8, %10, %cst_12 {dimension_numbers = #tpu.dot_dimension_numbers<[1], [0], [0], [1], [0, 0, 1, 1], [], []>} : vector<16x128xbf16>, vector<128x384xbf16>, vector<16x384xf32> -> vector<16x384xf32>
    %c0_13 = arith.constant 0 : index
    %c0_14 = arith.constant 0 : index
    %c0_15 = arith.constant 0 : index
    %12 = vector.load %arg3[%c0_13, %c0_14, %c0_15] : memref<2x1x384xf32, #tpu.memory_space<vmem>>, vector<1x1x384xf32>
    %13 = vector.shape_cast %12 : vector<1x1x384xf32> to vector<1x384xf32>
    %14 = vector.broadcast %13 : vector<1x384xf32> to vector<16x384xf32>
    %15 = arith.addf %11, %14 : vector<16x384xf32>
    %16 = vector.extract_strided_slice %15 {offsets = [0, 0], sizes = [16, 128], strides = [1, 1]} : vector<16x384xf32> to vector<16x128xf32>
    %17 = vector.extract_strided_slice %15 {offsets = [0, 128], sizes = [16, 128], strides = [1, 1]} : vector<16x384xf32> to vector<16x128xf32>
    %18 = vector.extract_strided_slice %15 {offsets = [0, 256], sizes = [16, 128], strides = [1, 1]} : vector<16x384xf32> to vector<16x128xf32>
    %19 = arith.truncf %16 : vector<16x128xf32> to vector<16x128xbf16>
    %20 = arith.truncf %17 : vector<16x128xf32> to vector<16x128xbf16>
    %cst_16 = arith.constant dense<0.000000e+00> : vector<16x16xf32>
    %21 = tpu.matmul %19, %20, %cst_16 {dimension_numbers = #tpu.dot_dimension_numbers<[1], [1], [0], [0], [0, 0, 1, 0], [], []>} : vector<16x128xbf16>, vector<16x128xbf16>, vector<16x16xf32> -> vector<16x16xf32>
    %cst_17 = arith.constant dense<0xFF800000> : vector<16xf32>
    %22 = vector.multi_reduction <maximumf>, %21, %cst_17 [1] : vector<16x16xf32> to vector<16xf32>
    %23 = vector.shape_cast %22 : vector<16xf32> to vector<16x1xf32>
    %24 = vector.broadcast %23 : vector<16x1xf32> to vector<16x16xf32>
    %25 = arith.subf %21, %24 : vector<16x16xf32>
    %26 = math.exp %25 : vector<16x16xf32>
    %cst_18 = arith.constant dense<0.000000e+00> : vector<16xf32>
    %27 = vector.multi_reduction <add>, %26, %cst_18 [1] : vector<16x16xf32> to vector<16xf32>
    %28 = vector.shape_cast %27 : vector<16xf32> to vector<16x1xf32>
    %29 = tpu.reciprocal %28 {approx = true} : vector<16x1xf32> -> vector<16x1xf32>
    %30 = vector.broadcast %29 : vector<16x1xf32> to vector<16x16xf32>
    %31 = arith.mulf %26, %30 : vector<16x16xf32>
    %32 = arith.truncf %31 : vector<16x16xf32> to vector<16x16xbf16>
    %33 = arith.truncf %18 : vector<16x128xf32> to vector<16x128xbf16>
    %cst_19 = arith.constant dense<0.000000e+00> : vector<16x128xf32>
    %34 = tpu.matmul %32, %33, %cst_19 {dimension_numbers = #tpu.dot_dimension_numbers<[1], [0], [0], [1], [0, 0, 1, 1], [], []>} : vector<16x16xbf16>, vector<16x128xbf16>, vector<16x128xf32> -> vector<16x128xf32>
    %c0_20 = arith.constant 0 : index
    %c0_21 = arith.constant 0 : index
    %c0_22 = arith.constant 0 : index
    %35 = vector.load %arg4[%c0_20, %c0_21, %c0_22] : memref<2x128x128xbf16, #tpu.memory_space<vmem>>, vector<1x128x128xbf16>
    %36 = vector.shape_cast %35 : vector<1x128x128xbf16> to vector<128x128xbf16>
    %c0_23 = arith.constant 0 : index
    %c0_24 = arith.constant 0 : index
    %c0_25 = arith.constant 0 : index
    %37 = vector.load %arg5[%c0_23, %c0_24, %c0_25] : memref<2x1x128xf32, #tpu.memory_space<vmem>>, vector<1x1x128xf32>
    %38 = vector.shape_cast %37 : vector<1x1x128xf32> to vector<1x128xf32>
    %39 = arith.truncf %34 : vector<16x128xf32> to vector<16x128xbf16>
    %cst_26 = arith.constant dense<0.000000e+00> : vector<16x128xf32>
    %40 = tpu.matmul %39, %36, %cst_26 {dimension_numbers = #tpu.dot_dimension_numbers<[1], [0], [0], [1], [0, 0, 1, 1], [], []>} : vector<16x128xbf16>, vector<128x128xbf16>, vector<16x128xf32> -> vector<16x128xf32>
    %41 = arith.truncf %40 : vector<16x128xf32> to vector<16x128xbf16>
    %cst_27 = arith.constant dense<0.000000e+00> : vector<16x128xf32>
    %42 = tpu.matmul %0, %41, %cst_27 {dimension_numbers = #tpu.dot_dimension_numbers<[1], [0], [0], [1], [0, 0, 1, 1], [], []>} : vector<16x16xbf16>, vector<16x128xbf16>, vector<16x128xf32> -> vector<16x128xf32>
    %43 = vector.broadcast %38 : vector<1x128xf32> to vector<16x128xf32>
    %44 = arith.addf %42, %43 : vector<16x128xf32>
    %cst_28 = arith.constant dense<0.000000e+00> : vector<16xf32>
    %45 = vector.multi_reduction <add>, %44, %cst_28 [1] : vector<16x128xf32> to vector<16xf32>
    %46 = vector.shape_cast %45 : vector<16xf32> to vector<16x1xf32>
    %cst_29 = arith.constant 3.125000e-02 : f32
    %47 = vector.broadcast %cst_29 : f32 to vector<16x1xf32>
    %48 = arith.mulf %46, %47 : vector<16x1xf32>
    %49 = arith.mulf %44, %44 : vector<16x128xf32>
    %cst_30 = arith.constant dense<0.000000e+00> : vector<16xf32>
    %50 = vector.multi_reduction <add>, %49, %cst_30 [1] : vector<16x128xf32> to vector<16xf32>
    %51 = vector.shape_cast %50 : vector<16xf32> to vector<16x1xf32>
    %cst_31 = arith.constant 3.125000e-02 : f32
    %52 = vector.broadcast %cst_31 : f32 to vector<16x1xf32>
    %53 = arith.mulf %51, %52 : vector<16x1xf32>
    %54 = arith.mulf %48, %48 : vector<16x1xf32>
    %55 = arith.subf %53, %54 : vector<16x1xf32>
    %56 = vector.broadcast %48 : vector<16x1xf32> to vector<16x128xf32>
    %57 = arith.subf %44, %56 : vector<16x128xf32>
    %cst_32 = arith.constant 9.99999974E-6 : f32
    %58 = vector.broadcast %cst_32 : f32 to vector<16x1xf32>
    %59 = arith.addf %55, %58 : vector<16x1xf32>
    %60 = math.rsqrt %59 : vector<16x1xf32>
    %61 = vector.broadcast %60 : vector<16x1xf32> to vector<16x128xf32>
    %62 = arith.mulf %57, %61 : vector<16x128xf32>
    %63 = vector.broadcast %3 : vector<1x128xf32> to vector<16x128xf32>
    %64 = arith.mulf %62, %63 : vector<16x128xf32>
    %65 = vector.broadcast %5 : vector<1x128xf32> to vector<16x128xf32>
    %66 = arith.addf %64, %65 : vector<16x128xf32>
    %67 = arith.addf %66, %1 : vector<16x128xf32>
    %c0_33 = arith.constant 0 : index
    %c0_34 = arith.constant 0 : index
    %c0_35 = arith.constant 0 : index
    %68 = vector.load %arg6[%c0_33, %c0_34, %c0_35] : memref<2x128x128xbf16, #tpu.memory_space<vmem>>, vector<1x128x128xbf16>
    %69 = vector.shape_cast %68 : vector<1x128x128xbf16> to vector<128x128xbf16>
    %c0_36 = arith.constant 0 : index
    %c0_37 = arith.constant 0 : index
    %c0_38 = arith.constant 0 : index
    %70 = vector.load %arg7[%c0_36, %c0_37, %c0_38] : memref<2x1x128xf32, #tpu.memory_space<vmem>>, vector<1x1x128xf32>
    %71 = vector.shape_cast %70 : vector<1x1x128xf32> to vector<1x128xf32>
    %72 = arith.truncf %67 : vector<16x128xf32> to vector<16x128xbf16>
    %cst_39 = arith.constant dense<0.000000e+00> : vector<16x128xf32>
    %73 = tpu.matmul %72, %69, %cst_39 {dimension_numbers = #tpu.dot_dimension_numbers<[1], [0], [0], [1], [0, 0, 1, 1], [], []>} : vector<16x128xbf16>, vector<128x128xbf16>, vector<16x128xf32> -> vector<16x128xf32>
    %74 = arith.truncf %73 : vector<16x128xf32> to vector<16x128xbf16>
    %cst_40 = arith.constant dense<0.000000e+00> : vector<16x128xf32>
    %75 = tpu.matmul %0, %74, %cst_40 {dimension_numbers = #tpu.dot_dimension_numbers<[1], [0], [0], [1], [0, 0, 1, 1], [], []>} : vector<16x16xbf16>, vector<16x128xbf16>, vector<16x128xf32> -> vector<16x128xf32>
    %76 = vector.broadcast %71 : vector<1x128xf32> to vector<16x128xf32>
    %77 = arith.addf %75, %76 : vector<16x128xf32>
    %cst_41 = arith.constant 0.000000e+00 : f32
    %78 = vector.broadcast %cst_41 : f32 to vector<16x128xf32>
    %79 = arith.maximumf %77, %78 : vector<16x128xf32>
    %c0_42 = arith.constant 0 : index
    %c0_43 = arith.constant 0 : index
    %c0_44 = arith.constant 0 : index
    %80 = vector.load %arg8[%c0_42, %c0_43, %c0_44] : memref<2x128x128xbf16, #tpu.memory_space<vmem>>, vector<1x128x128xbf16>
    %81 = vector.shape_cast %80 : vector<1x128x128xbf16> to vector<128x128xbf16>
    %c0_45 = arith.constant 0 : index
    %c0_46 = arith.constant 0 : index
    %c0_47 = arith.constant 0 : index
    %82 = vector.load %arg9[%c0_45, %c0_46, %c0_47] : memref<2x1x128xf32, #tpu.memory_space<vmem>>, vector<1x1x128xf32>
    %83 = vector.shape_cast %82 : vector<1x1x128xf32> to vector<1x128xf32>
    %84 = arith.truncf %79 : vector<16x128xf32> to vector<16x128xbf16>
    %cst_48 = arith.constant dense<0.000000e+00> : vector<16x128xf32>
    %85 = tpu.matmul %84, %81, %cst_48 {dimension_numbers = #tpu.dot_dimension_numbers<[1], [0], [0], [1], [0, 0, 1, 1], [], []>} : vector<16x128xbf16>, vector<128x128xbf16>, vector<16x128xf32> -> vector<16x128xf32>
    %86 = arith.truncf %85 : vector<16x128xf32> to vector<16x128xbf16>
    %cst_49 = arith.constant dense<0.000000e+00> : vector<16x128xf32>
    %87 = tpu.matmul %0, %86, %cst_49 {dimension_numbers = #tpu.dot_dimension_numbers<[1], [0], [0], [1], [0, 0, 1, 1], [], []>} : vector<16x16xbf16>, vector<16x128xbf16>, vector<16x128xf32> -> vector<16x128xf32>
    %88 = vector.broadcast %83 : vector<1x128xf32> to vector<16x128xf32>
    %89 = arith.addf %87, %88 : vector<16x128xf32>
    %cst_50 = arith.constant dense<0.000000e+00> : vector<16xf32>
    %90 = vector.multi_reduction <add>, %89, %cst_50 [1] : vector<16x128xf32> to vector<16xf32>
    %91 = vector.shape_cast %90 : vector<16xf32> to vector<16x1xf32>
    %cst_51 = arith.constant 3.125000e-02 : f32
    %92 = vector.broadcast %cst_51 : f32 to vector<16x1xf32>
    %93 = arith.mulf %91, %92 : vector<16x1xf32>
    %94 = arith.mulf %89, %89 : vector<16x128xf32>
    %cst_52 = arith.constant dense<0.000000e+00> : vector<16xf32>
    %95 = vector.multi_reduction <add>, %94, %cst_52 [1] : vector<16x128xf32> to vector<16xf32>
    %96 = vector.shape_cast %95 : vector<16xf32> to vector<16x1xf32>
    %cst_53 = arith.constant 3.125000e-02 : f32
    %97 = vector.broadcast %cst_53 : f32 to vector<16x1xf32>
    %98 = arith.mulf %96, %97 : vector<16x1xf32>
    %99 = arith.mulf %93, %93 : vector<16x1xf32>
    %100 = arith.subf %98, %99 : vector<16x1xf32>
    %101 = vector.broadcast %93 : vector<16x1xf32> to vector<16x128xf32>
    %102 = arith.subf %89, %101 : vector<16x128xf32>
    %cst_54 = arith.constant 9.99999974E-6 : f32
    %103 = vector.broadcast %cst_54 : f32 to vector<16x1xf32>
    %104 = arith.addf %100, %103 : vector<16x1xf32>
    %105 = math.rsqrt %104 : vector<16x1xf32>
    %106 = vector.broadcast %105 : vector<16x1xf32> to vector<16x128xf32>
    %107 = arith.mulf %102, %106 : vector<16x128xf32>
    %108 = vector.broadcast %3 : vector<1x128xf32> to vector<16x128xf32>
    %109 = arith.mulf %107, %108 : vector<16x128xf32>
    %110 = vector.broadcast %5 : vector<1x128xf32> to vector<16x128xf32>
    %111 = arith.addf %109, %110 : vector<16x128xf32>
    %112 = arith.truncf %31 : vector<16x16xf32> to vector<16x16xbf16>
    %c1 = arith.constant 1 : index
    %c0_55 = arith.constant 0 : index
    %c0_56 = arith.constant 0 : index
    %113 = vector.load %arg10[%c1, %c0_55, %c0_56] : memref<2x1x128xf32, #tpu.memory_space<vmem>>, vector<1x1x128xf32>
    %114 = vector.shape_cast %113 : vector<1x1x128xf32> to vector<1x128xf32>
    %c1_57 = arith.constant 1 : index
    %c0_58 = arith.constant 0 : index
    %c0_59 = arith.constant 0 : index
    %115 = vector.load %arg11[%c1_57, %c0_58, %c0_59] : memref<2x1x128xf32, #tpu.memory_space<vmem>>, vector<1x1x128xf32>
    %116 = vector.shape_cast %115 : vector<1x1x128xf32> to vector<1x128xf32>
    %117 = arith.truncf %111 : vector<16x128xf32> to vector<16x128xbf16>
    %cst_60 = arith.constant dense<0.000000e+00> : vector<16x128xf32>
    %118 = tpu.matmul %0, %117, %cst_60 {dimension_numbers = #tpu.dot_dimension_numbers<[1], [0], [0], [1], [0, 0, 1, 1], [], []>} : vector<16x16xbf16>, vector<16x128xbf16>, vector<16x128xf32> -> vector<16x128xf32>
    %119 = arith.truncf %118 : vector<16x128xf32> to vector<16x128xbf16>
    %c1_61 = arith.constant 1 : index
    %c0_62 = arith.constant 0 : index
    %c0_63 = arith.constant 0 : index
    %120 = vector.load %arg2[%c1_61, %c0_62, %c0_63] : memref<2x128x384xbf16, #tpu.memory_space<vmem>>, vector<1x128x384xbf16>
    %121 = vector.shape_cast %120 : vector<1x128x384xbf16> to vector<128x384xbf16>
    %cst_64 = arith.constant dense<0.000000e+00> : vector<16x384xf32>
    %122 = tpu.matmul %119, %121, %cst_64 {dimension_numbers = #tpu.dot_dimension_numbers<[1], [0], [0], [1], [0, 0, 1, 1], [], []>} : vector<16x128xbf16>, vector<128x384xbf16>, vector<16x384xf32> -> vector<16x384xf32>
    %c1_65 = arith.constant 1 : index
    %c0_66 = arith.constant 0 : index
    %c0_67 = arith.constant 0 : index
    %123 = vector.load %arg3[%c1_65, %c0_66, %c0_67] : memref<2x1x384xf32, #tpu.memory_space<vmem>>, vector<1x1x384xf32>
    %124 = vector.shape_cast %123 : vector<1x1x384xf32> to vector<1x384xf32>
    %125 = vector.broadcast %124 : vector<1x384xf32> to vector<16x384xf32>
    %126 = arith.addf %122, %125 : vector<16x384xf32>
    %127 = vector.extract_strided_slice %126 {offsets = [0, 0], sizes = [16, 128], strides = [1, 1]} : vector<16x384xf32> to vector<16x128xf32>
    %128 = vector.extract_strided_slice %126 {offsets = [0, 128], sizes = [16, 128], strides = [1, 1]} : vector<16x384xf32> to vector<16x128xf32>
    %129 = vector.extract_strided_slice %126 {offsets = [0, 256], sizes = [16, 128], strides = [1, 1]} : vector<16x384xf32> to vector<16x128xf32>
    %130 = arith.truncf %127 : vector<16x128xf32> to vector<16x128xbf16>
    %131 = arith.truncf %128 : vector<16x128xf32> to vector<16x128xbf16>
    %cst_68 = arith.constant dense<0.000000e+00> : vector<16x16xf32>
    %132 = tpu.matmul %130, %131, %cst_68 {dimension_numbers = #tpu.dot_dimension_numbers<[1], [1], [0], [0], [0, 0, 1, 0], [], []>} : vector<16x128xbf16>, vector<16x128xbf16>, vector<16x16xf32> -> vector<16x16xf32>
    %133 = arith.extf %112 : vector<16x16xbf16> to vector<16x16xf32>
    %134 = arith.addf %132, %133 : vector<16x16xf32>
    %cst_69 = arith.constant dense<0xFF800000> : vector<16xf32>
    %135 = vector.multi_reduction <maximumf>, %134, %cst_69 [1] : vector<16x16xf32> to vector<16xf32>
    %136 = vector.shape_cast %135 : vector<16xf32> to vector<16x1xf32>
    %137 = vector.broadcast %136 : vector<16x1xf32> to vector<16x16xf32>
    %138 = arith.subf %134, %137 : vector<16x16xf32>
    %139 = math.exp %138 : vector<16x16xf32>
    %cst_70 = arith.constant dense<0.000000e+00> : vector<16xf32>
    %140 = vector.multi_reduction <add>, %139, %cst_70 [1] : vector<16x16xf32> to vector<16xf32>
    %141 = vector.shape_cast %140 : vector<16xf32> to vector<16x1xf32>
    %142 = tpu.reciprocal %141 {approx = true} : vector<16x1xf32> -> vector<16x1xf32>
    %143 = vector.broadcast %142 : vector<16x1xf32> to vector<16x16xf32>
    %144 = arith.mulf %139, %143 : vector<16x16xf32>
    %145 = arith.truncf %144 : vector<16x16xf32> to vector<16x16xbf16>
    %146 = arith.truncf %129 : vector<16x128xf32> to vector<16x128xbf16>
    %cst_71 = arith.constant dense<0.000000e+00> : vector<16x128xf32>
    %147 = tpu.matmul %145, %146, %cst_71 {dimension_numbers = #tpu.dot_dimension_numbers<[1], [0], [0], [1], [0, 0, 1, 1], [], []>} : vector<16x16xbf16>, vector<16x128xbf16>, vector<16x128xf32> -> vector<16x128xf32>
    %c1_72 = arith.constant 1 : index
    %c0_73 = arith.constant 0 : index
    %c0_74 = arith.constant 0 : index
    %148 = vector.load %arg4[%c1_72, %c0_73, %c0_74] : memref<2x128x128xbf16, #tpu.memory_space<vmem>>, vector<1x128x128xbf16>
    %149 = vector.shape_cast %148 : vector<1x128x128xbf16> to vector<128x128xbf16>
    %c1_75 = arith.constant 1 : index
    %c0_76 = arith.constant 0 : index
    %c0_77 = arith.constant 0 : index
    %150 = vector.load %arg5[%c1_75, %c0_76, %c0_77] : memref<2x1x128xf32, #tpu.memory_space<vmem>>, vector<1x1x128xf32>
    %151 = vector.shape_cast %150 : vector<1x1x128xf32> to vector<1x128xf32>
    %152 = arith.truncf %147 : vector<16x128xf32> to vector<16x128xbf16>
    %cst_78 = arith.constant dense<0.000000e+00> : vector<16x128xf32>
    %153 = tpu.matmul %152, %149, %cst_78 {dimension_numbers = #tpu.dot_dimension_numbers<[1], [0], [0], [1], [0, 0, 1, 1], [], []>} : vector<16x128xbf16>, vector<128x128xbf16>, vector<16x128xf32> -> vector<16x128xf32>
    %154 = arith.truncf %153 : vector<16x128xf32> to vector<16x128xbf16>
    %cst_79 = arith.constant dense<0.000000e+00> : vector<16x128xf32>
    %155 = tpu.matmul %0, %154, %cst_79 {dimension_numbers = #tpu.dot_dimension_numbers<[1], [0], [0], [1], [0, 0, 1, 1], [], []>} : vector<16x16xbf16>, vector<16x128xbf16>, vector<16x128xf32> -> vector<16x128xf32>
    %156 = vector.broadcast %151 : vector<1x128xf32> to vector<16x128xf32>
    %157 = arith.addf %155, %156 : vector<16x128xf32>
    %cst_80 = arith.constant dense<0.000000e+00> : vector<16xf32>
    %158 = vector.multi_reduction <add>, %157, %cst_80 [1] : vector<16x128xf32> to vector<16xf32>
    %159 = vector.shape_cast %158 : vector<16xf32> to vector<16x1xf32>
    %cst_81 = arith.constant 3.125000e-02 : f32
    %160 = vector.broadcast %cst_81 : f32 to vector<16x1xf32>
    %161 = arith.mulf %159, %160 : vector<16x1xf32>
    %162 = arith.mulf %157, %157 : vector<16x128xf32>
    %cst_82 = arith.constant dense<0.000000e+00> : vector<16xf32>
    %163 = vector.multi_reduction <add>, %162, %cst_82 [1] : vector<16x128xf32> to vector<16xf32>
    %164 = vector.shape_cast %163 : vector<16xf32> to vector<16x1xf32>
    %cst_83 = arith.constant 3.125000e-02 : f32
    %165 = vector.broadcast %cst_83 : f32 to vector<16x1xf32>
    %166 = arith.mulf %164, %165 : vector<16x1xf32>
    %167 = arith.mulf %161, %161 : vector<16x1xf32>
    %168 = arith.subf %166, %167 : vector<16x1xf32>
    %169 = vector.broadcast %161 : vector<16x1xf32> to vector<16x128xf32>
    %170 = arith.subf %157, %169 : vector<16x128xf32>
    %cst_84 = arith.constant 9.99999974E-6 : f32
    %171 = vector.broadcast %cst_84 : f32 to vector<16x1xf32>
    %172 = arith.addf %168, %171 : vector<16x1xf32>
    %173 = math.rsqrt %172 : vector<16x1xf32>
    %174 = vector.broadcast %173 : vector<16x1xf32> to vector<16x128xf32>
    %175 = arith.mulf %170, %174 : vector<16x128xf32>
    %176 = vector.broadcast %114 : vector<1x128xf32> to vector<16x128xf32>
    %177 = arith.mulf %175, %176 : vector<16x128xf32>
    %178 = vector.broadcast %116 : vector<1x128xf32> to vector<16x128xf32>
    %179 = arith.addf %177, %178 : vector<16x128xf32>
    %180 = arith.addf %179, %111 : vector<16x128xf32>
    %c1_85 = arith.constant 1 : index
    %c0_86 = arith.constant 0 : index
    %c0_87 = arith.constant 0 : index
    %181 = vector.load %arg6[%c1_85, %c0_86, %c0_87] : memref<2x128x128xbf16, #tpu.memory_space<vmem>>, vector<1x128x128xbf16>
    %182 = vector.shape_cast %181 : vector<1x128x128xbf16> to vector<128x128xbf16>
    %c1_88 = arith.constant 1 : index
    %c0_89 = arith.constant 0 : index
    %c0_90 = arith.constant 0 : index
    %183 = vector.load %arg7[%c1_88, %c0_89, %c0_90] : memref<2x1x128xf32, #tpu.memory_space<vmem>>, vector<1x1x128xf32>
    %184 = vector.shape_cast %183 : vector<1x1x128xf32> to vector<1x128xf32>
    %185 = arith.truncf %180 : vector<16x128xf32> to vector<16x128xbf16>
    %cst_91 = arith.constant dense<0.000000e+00> : vector<16x128xf32>
    %186 = tpu.matmul %185, %182, %cst_91 {dimension_numbers = #tpu.dot_dimension_numbers<[1], [0], [0], [1], [0, 0, 1, 1], [], []>} : vector<16x128xbf16>, vector<128x128xbf16>, vector<16x128xf32> -> vector<16x128xf32>
    %187 = arith.truncf %186 : vector<16x128xf32> to vector<16x128xbf16>
    %cst_92 = arith.constant dense<0.000000e+00> : vector<16x128xf32>
    %188 = tpu.matmul %0, %187, %cst_92 {dimension_numbers = #tpu.dot_dimension_numbers<[1], [0], [0], [1], [0, 0, 1, 1], [], []>} : vector<16x16xbf16>, vector<16x128xbf16>, vector<16x128xf32> -> vector<16x128xf32>
    %189 = vector.broadcast %184 : vector<1x128xf32> to vector<16x128xf32>
    %190 = arith.addf %188, %189 : vector<16x128xf32>
    %cst_93 = arith.constant 0.000000e+00 : f32
    %191 = vector.broadcast %cst_93 : f32 to vector<16x128xf32>
    %192 = arith.maximumf %190, %191 : vector<16x128xf32>
    %c1_94 = arith.constant 1 : index
    %c0_95 = arith.constant 0 : index
    %c0_96 = arith.constant 0 : index
    %193 = vector.load %arg8[%c1_94, %c0_95, %c0_96] : memref<2x128x128xbf16, #tpu.memory_space<vmem>>, vector<1x128x128xbf16>
    %194 = vector.shape_cast %193 : vector<1x128x128xbf16> to vector<128x128xbf16>
    %c1_97 = arith.constant 1 : index
    %c0_98 = arith.constant 0 : index
    %c0_99 = arith.constant 0 : index
    %195 = vector.load %arg9[%c1_97, %c0_98, %c0_99] : memref<2x1x128xf32, #tpu.memory_space<vmem>>, vector<1x1x128xf32>
    %196 = vector.shape_cast %195 : vector<1x1x128xf32> to vector<1x128xf32>
    %197 = arith.truncf %192 : vector<16x128xf32> to vector<16x128xbf16>
    %cst_100 = arith.constant dense<0.000000e+00> : vector<16x128xf32>
    %198 = tpu.matmul %197, %194, %cst_100 {dimension_numbers = #tpu.dot_dimension_numbers<[1], [0], [0], [1], [0, 0, 1, 1], [], []>} : vector<16x128xbf16>, vector<128x128xbf16>, vector<16x128xf32> -> vector<16x128xf32>
    %199 = arith.truncf %198 : vector<16x128xf32> to vector<16x128xbf16>
    %cst_101 = arith.constant dense<0.000000e+00> : vector<16x128xf32>
    %200 = tpu.matmul %0, %199, %cst_101 {dimension_numbers = #tpu.dot_dimension_numbers<[1], [0], [0], [1], [0, 0, 1, 1], [], []>} : vector<16x16xbf16>, vector<16x128xbf16>, vector<16x128xf32> -> vector<16x128xf32>
    %201 = vector.broadcast %196 : vector<1x128xf32> to vector<16x128xf32>
    %202 = arith.addf %200, %201 : vector<16x128xf32>
    %cst_102 = arith.constant dense<0.000000e+00> : vector<16xf32>
    %203 = vector.multi_reduction <add>, %202, %cst_102 [1] : vector<16x128xf32> to vector<16xf32>
    %204 = vector.shape_cast %203 : vector<16xf32> to vector<16x1xf32>
    %cst_103 = arith.constant 3.125000e-02 : f32
    %205 = vector.broadcast %cst_103 : f32 to vector<16x1xf32>
    %206 = arith.mulf %204, %205 : vector<16x1xf32>
    %207 = arith.mulf %202, %202 : vector<16x128xf32>
    %cst_104 = arith.constant dense<0.000000e+00> : vector<16xf32>
    %208 = vector.multi_reduction <add>, %207, %cst_104 [1] : vector<16x128xf32> to vector<16xf32>
    %209 = vector.shape_cast %208 : vector<16xf32> to vector<16x1xf32>
    %cst_105 = arith.constant 3.125000e-02 : f32
    %210 = vector.broadcast %cst_105 : f32 to vector<16x1xf32>
    %211 = arith.mulf %209, %210 : vector<16x1xf32>
    %212 = arith.mulf %206, %206 : vector<16x1xf32>
    %213 = arith.subf %211, %212 : vector<16x1xf32>
    %214 = vector.broadcast %206 : vector<16x1xf32> to vector<16x128xf32>
    %215 = arith.subf %202, %214 : vector<16x128xf32>
    %cst_106 = arith.constant 9.99999974E-6 : f32
    %216 = vector.broadcast %cst_106 : f32 to vector<16x1xf32>
    %217 = arith.addf %213, %216 : vector<16x1xf32>
    %218 = math.rsqrt %217 : vector<16x1xf32>
    %219 = vector.broadcast %218 : vector<16x1xf32> to vector<16x128xf32>
    %220 = arith.mulf %215, %219 : vector<16x128xf32>
    %221 = vector.broadcast %114 : vector<1x128xf32> to vector<16x128xf32>
    %222 = arith.mulf %220, %221 : vector<16x128xf32>
    %223 = vector.broadcast %116 : vector<1x128xf32> to vector<16x128xf32>
    %224 = arith.addf %222, %223 : vector<16x128xf32>
    %225 = arith.truncf %224 : vector<16x128xf32> to vector<16x128xbf16>
    %c0_107 = arith.constant 0 : index
    %c0_108 = arith.constant 0 : index
    %226 = vector.load %arg12[%c0_107, %c0_108] : memref<128x128xbf16, #tpu.memory_space<vmem>>, vector<128x128xbf16>
    %cst_109 = arith.constant dense<0.000000e+00> : vector<16x128xf32>
    %227 = tpu.matmul %225, %226, %cst_109 {dimension_numbers = #tpu.dot_dimension_numbers<[1], [0], [0], [1], [0, 0, 1, 1], [], []>} : vector<16x128xbf16>, vector<128x128xbf16>, vector<16x128xf32> -> vector<16x128xf32>
    %c0_110 = arith.constant 0 : index
    %c0_111 = arith.constant 0 : index
    %228 = vector.load %arg13[%c0_110, %c0_111] : memref<1x128xf32, #tpu.memory_space<vmem>>, vector<1x128xf32>
    %229 = vector.broadcast %228 : vector<1x128xf32> to vector<16x128xf32>
    %230 = arith.addf %227, %229 : vector<16x128xf32>
    %cst_112 = arith.constant 0.000000e+00 : f32
    %231 = vector.broadcast %cst_112 : f32 to vector<16x128xf32>
    %232 = arith.maximumf %230, %231 : vector<16x128xf32>
    %233 = arith.truncf %232 : vector<16x128xf32> to vector<16x128xbf16>
    %c0_113 = arith.constant 0 : index
    %c0_114 = arith.constant 0 : index
    %234 = vector.load %arg14[%c0_113, %c0_114] : memref<128x128xbf16, #tpu.memory_space<vmem>>, vector<128x128xbf16>
    %cst_115 = arith.constant dense<0.000000e+00> : vector<16x128xf32>
    %235 = tpu.matmul %233, %234, %cst_115 {dimension_numbers = #tpu.dot_dimension_numbers<[1], [0], [0], [1], [0, 0, 1, 1], [], []>} : vector<16x128xbf16>, vector<128x128xbf16>, vector<16x128xf32> -> vector<16x128xf32>
    %c0_116 = arith.constant 0 : index
    %c0_117 = arith.constant 0 : index
    %236 = vector.load %arg15[%c0_116, %c0_117] : memref<1x128xf32, #tpu.memory_space<vmem>>, vector<1x128xf32>
    %237 = vector.broadcast %236 : vector<1x128xf32> to vector<16x128xf32>
    %238 = arith.addf %235, %237 : vector<16x128xf32>
    %c0_118 = arith.constant 0 : index
    %c0_119 = arith.constant 0 : index
    %239 = vector.load %arg17[%c0_118, %c0_119] : memref<16x128xf32, #tpu.memory_space<vmem>>, vector<16x128xf32>
    tpu.vector_store %arg17[%c0_118, %c0_119], %232 {strides = array<i32>} : memref<16x128xf32, #tpu.memory_space<vmem>>, vector<16x128xf32>,
    %c0_120 = arith.constant 0 : index
    %c0_121 = arith.constant 0 : index
    %240 = vector.load %arg16[%c0_120, %c0_121] : memref<16x128xf32, #tpu.memory_space<vmem>>, vector<16x128xf32>
    tpu.vector_store %arg16[%c0_120, %c0_121], %238 {strides = array<i32>} : memref<16x128xf32, #tpu.memory_space<vmem>>, vector<16x128xf32>,
    return
  }
}

</mosaic_0001>

<llo_original>
// kernel: hcl_forward.1
$region0: #{hcl_forward.1}
  #allocation0 [shape = 'u32[]', space=smem, size = 0x4, offset = 0x4, fixed_abs, tag = 'smem constant byte address 0x4 - core index']
  #allocation1 [shape = 'u32[144,128]{1,0:T(1,128)}', space=vmem, size = 0x12000, scoped, tag = 'internal scratch']
  %s0 = inlined_call_operand.vmem [shape: bf16[16,16], index: 0, kind: input, shape index: {}]
  %s1 = inlined_call_operand.vmem [shape: f32[16,128], index: 1, kind: input, shape index: {}]
  %s2 = inlined_call_operand.hbm [shape: bf16[2,128,384], index: 2, kind: input, shape index: {}]
  %s3 = inlined_call_operand.vmem [shape: f32[2,1,384], index: 3, kind: input, shape index: {}]
  %s4 = inlined_call_operand.vmem [shape: bf16[2,128,128], index: 4, kind: input, shape index: {}]
  %s5 = inlined_call_operand.vmem [shape: f32[2,1,128], index: 5, kind: input, shape index: {}]
  %s6 = inlined_call_operand.hbm [shape: bf16[2,128,128], index: 6, kind: input, shape index: {}]
  %s7 = inlined_call_operand.vmem [shape: f32[2,1,128], index: 7, kind: input, shape index: {}]
  %s8 = inlined_call_operand.hbm [shape: bf16[2,128,128], index: 8, kind: input, shape index: {}]
  %s9 = inlined_call_operand.vmem [shape: f32[2,1,128], index: 9, kind: input, shape index: {}]
  %s10 = inlined_call_operand.vmem [shape: f32[2,1,128], index: 10, kind: input, shape index: {}]
  %s11 = inlined_call_operand.vmem [shape: f32[2,1,128], index: 11, kind: input, shape index: {}]
  %s12 = inlined_call_operand.hbm [shape: bf16[128,128], index: 12, kind: input, shape index: {}]
  %s13 = inlined_call_operand.vmem [shape: f32[1,128], index: 13, kind: input, shape index: {}]
  %s14 = inlined_call_operand.hbm [shape: bf16[128,128], index: 14, kind: input, shape index: {}]
  %s15 = inlined_call_operand.vmem [shape: f32[1,128], index: 15, kind: input, shape index: {}]
  %s16 = inlined_call_operand.vmem [shape: f32[16,128], index: 16, kind: output, shape index: {0}]
  %s17 = inlined_call_operand.hbm [shape: f32[16,128], index: 17, kind: output, shape index: {1}]
  %18 = xla_tuple %s16, %s17
  %s19 = sld [smem:[#allocation0]]
  $region102: #{hcl_forward.1} parent=0
    _
  %s21 = ssub.s32 1, %s19
  %s22 = scalar_select 0, %s21, %s19
  $region1: #{hcl_forward.1} parent=0
    #allocation2 [shape = 'u8[196608]{0}', space=vmem, size = 0x30000, scoped, tag = 'input window, operand 2, single buffered']
    #allocation3 [shape = 's32[1]{0}', space=sflag, size = 0x4, scoped, tag = 'scoped memory for hcl_forward.1']
    #allocation4 [shape = 's32[1]{0}', space=sflag, size = 0x4, scoped, tag = 'scoped memory for hcl_forward.1']
    #allocation5 [shape = 'u8[65536]{0}', space=vmem, size = 0x10000, scoped, tag = 'input window, operand 6, single buffered']
    #allocation6 [shape = 's32[1]{0}', space=sflag, size = 0x4, scoped, tag = 'scoped memory for hcl_forward.1']
    #allocation7 [shape = 'u8[65536]{0}', space=vmem, size = 0x10000, scoped, tag = 'input window, operand 8, single buffered']
    #allocation8 [shape = 'u8[32768]{0}', space=vmem, size = 0x8000, scoped, tag = 'input window, operand 12, single buffered']
    #allocation9 [shape = 's32[1]{0}', space=sflag, size = 0x4, scoped, tag = 'scoped memory for hcl_forward.1']
    #allocation10 [shape = 'u8[32768]{0}', space=vmem, size = 0x8000, scoped, tag = 'input window, operand 14, single buffered']
    #allocation11 [shape = 'u8[8192]{0}', space=vmem, size = 0x2000, scoped, tag = 'output window, operand 1, single buffered']
    %23 = vsyncpa [#allocation3], 0
    %24 = vsyncpa [#allocation6], 0
    %25 = vsyncpa [#allocation9], 0
    %26 = vsyncpa [#allocation4], 0
    // Predicated region
    $region2: #{hcl_forward.1} parent=1 // pred_check
      _
    $region3: #{hcl_forward.1} parent=1 // pred_check_branch
      %28 = sbr.rel (0) target = $region5
    $region4: #{hcl_forward.1} parent=1 // pred_region
      _
    $region5: #{hcl_forward.1} parent=1 // pred_fallthru
      _
    // Predicated region
    $region6: #{hcl_forward.1} parent=1 // pred_check
      _
    $region7: #{hcl_forward.1} parent=1 // pred_check_branch
      %30 = sbr.rel (0) target = $region9
    $region8: #{hcl_forward.1} parent=1 // pred_region
      _
    $region9: #{hcl_forward.1} parent=1 // pred_fallthru
      _
    // Predicated region
    $region10: #{hcl_forward.1} parent=1 // pred_check
      _
    $region11: #{hcl_forward.1} parent=1 // pred_check_branch
      %32 = sbr.rel (0) target = $region13
    $region12: #{hcl_forward.1} parent=1 // pred_region
      %s34 = ssub.s32 6144, 6144
      %35 = vsyncadd [#allocation3], %s34
      %s36 = sshll.u32 [#allocation2], 4
      %s37 = int_to_ptr.vmem [resolvable:$true] %s36
      %42 = dma.hbm_to_vmem [thread:$0]  %s2, 6144, %s37, [#allocation3], 192, 192, 12
    $region13: #{hcl_forward.1} parent=1 // pred_fallthru
      _
    // Predicated region
    $region14: #{hcl_forward.1} parent=1 // pred_check
      _
    $region15: #{hcl_forward.1} parent=1 // pred_check_branch
      %44 = sbr.rel (0) target = $region17
    $region16: #{hcl_forward.1} parent=1 // pred_region
      _
    $region17: #{hcl_forward.1} parent=1 // pred_fallthru
      _
    // Predicated region
    $region18: #{hcl_forward.1} parent=1 // pred_check
      _
    $region19: #{hcl_forward.1} parent=1 // pred_check_branch
      %46 = sbr.rel (0) target = $region21
    $region20: #{hcl_forward.1} parent=1 // pred_region
      _
    $region21: #{hcl_forward.1} parent=1 // pred_fallthru
      _
    // Predicated region
    $region22: #{hcl_forward.1} parent=1 // pred_check
      _
    $region23: #{hcl_forward.1} parent=1 // pred_check_branch
      %48 = sbr.rel (0) target = $region25
    $region24: #{hcl_forward.1} parent=1 // pred_region
      _
    $region25: #{hcl_forward.1} parent=1 // pred_fallthru
      _
    // Predicated region
    $region26: #{hcl_forward.1} parent=1 // pred_check
      _
    $region27: #{hcl_forward.1} parent=1 // pred_check_branch
      %50 = sbr.rel (0) target = $region29
    $region28: #{hcl_forward.1} parent=1 // pred_region
      %s52 = ssub.s32 2048, 2048
      %53 = vsyncadd [#allocation6], %s52
      %s54 = sshll.u32 [#allocation5], 4
      %s55 = int_to_ptr.vmem [resolvable:$true] %s54
      %60 = dma.hbm_to_vmem [thread:$0]  %s6, 2048, %s55, [#allocation6], 64, 64, 4
    $region29: #{hcl_forward.1} parent=1 // pred_fallthru
      _
    // Predicated region
    $region30: #{hcl_forward.1} parent=1 // pred_check
      _
    $region31: #{hcl_forward.1} parent=1 // pred_check_branch
      %62 = sbr.rel (0) target = $region33
    $region32: #{hcl_forward.1} parent=1 // pred_region
      _
    $region33: #{hcl_forward.1} parent=1 // pred_fallthru
      _
    // Predicated region
    $region34: #{hcl_forward.1} parent=1 // pred_check
      _
    $region35: #{hcl_forward.1} parent=1 // pred_check_branch
      %64 = sbr.rel (0) target = $region37
    $region36: #{hcl_forward.1} parent=1 // pred_region
      %s66 = ssub.s32 2048, 2048
      %67 = vsyncadd [#allocation6], %s66
      %s68 = sshll.u32 [#allocation7], 4
      %s69 = int_to_ptr.vmem [resolvable:$true] %s68
      %74 = dma.hbm_to_vmem [thread:$0]  %s8, 2048, %s69, [#allocation6], 64, 64, 4
    $region37: #{hcl_forward.1} parent=1 // pred_fallthru
      _
    // Predicated region
    $region38: #{hcl_forward.1} parent=1 // pred_check
      _
    $region39: #{hcl_forward.1} parent=1 // pred_check_branch
      %76 = sbr.rel (0) target = $region41
    $region40: #{hcl_forward.1} parent=1 // pred_region
      _
    $region41: #{hcl_forward.1} parent=1 // pred_fallthru
      _
    // Predicated region
    $region42: #{hcl_forward.1} parent=1 // pred_check
      _
    $region43: #{hcl_forward.1} parent=1 // pred_check_branch
      %78 = sbr.rel (0) target = $region45
    $region44: #{hcl_forward.1} parent=1 // pred_region
      _
    $region45: #{hcl_forward.1} parent=1 // pred_fallthru
      _
    // Predicated region
    $region46: #{hcl_forward.1} parent=1 // pred_check
      _
    $region47: #{hcl_forward.1} parent=1 // pred_check_branch
      %80 = sbr.rel (0) target = $region49
    $region48: #{hcl_forward.1} parent=1 // pred_region
      _
    $region49: #{hcl_forward.1} parent=1 // pred_fallthru
      _
    // Predicated region
    $region50: #{hcl_forward.1} parent=1 // pred_check
      _
    $region51: #{hcl_forward.1} parent=1 // pred_check_branch
      %82 = sbr.rel (0) target = $region53
    $region52: #{hcl_forward.1} parent=1 // pred_region
      %s84 = ssub.s32 1024, 1024
      %85 = vsyncadd [#allocation9], %s84
      %s86 = sshll.u32 [#allocation8], 4
      %s87 = int_to_ptr.vmem [resolvable:$true] %s86
      %92 = dma.hbm_to_vmem [thread:$0]  %s12, 1024, %s87, [#allocation9], 64, 64, 4
    $region53: #{hcl_forward.1} parent=1 // pred_fallthru
      _
    // Predicated region
    $region54: #{hcl_forward.1} parent=1 // pred_check
      _
    $region55: #{hcl_forward.1} parent=1 // pred_check_branch
      %94 = sbr.rel (0) target = $region57
    $region56: #{hcl_forward.1} parent=1 // pred_region
      _
    $region57: #{hcl_forward.1} parent=1 // pred_fallthru
      _
    // Predicated region
    $region58: #{hcl_forward.1} parent=1 // pred_check
      _
    $region59: #{hcl_forward.1} parent=1 // pred_check_branch
      %96 = sbr.rel (0) target = $region61
    $region60: #{hcl_forward.1} parent=1 // pred_region
      %s98 = ssub.s32 1024, 1024
      %99 = vsyncadd [#allocation9], %s98
      %s100 = sshll.u32 [#allocation10], 4
      %s101 = int_to_ptr.vmem [resolvable:$true] %s100
      %106 = dma.hbm_to_vmem [thread:$0]  %s14, 1024, %s101, [#allocation9], 64, 64, 4
    $region61: #{hcl_forward.1} parent=1 // pred_fallthru
      _
    // Predicated region
    $region62: #{hcl_forward.1} parent=1 // pred_check
      _
    $region63: #{hcl_forward.1} parent=1 // pred_check_branch
      %108 = sbr.rel (0) target = $region65
    $region64: #{hcl_forward.1} parent=1 // pred_region
      _
    $region65: #{hcl_forward.1} parent=1 // pred_fallthru
      _
    // Predicated region
    $region66: #{hcl_forward.1} parent=1 // pred_check
      _
    $region67: #{hcl_forward.1} parent=1 // pred_check_branch
      %110 = sbr.rel (0) target = $region69
    $region68: #{hcl_forward.1} parent=1 // pred_region
      %111 = dma.done [#allocation3], 6144
    $region69: #{hcl_forward.1} parent=1 // pred_fallthru
      _
    // Predicated region
    $region70: #{hcl_forward.1} parent=1 // pred_check
      _
    $region71: #{hcl_forward.1} parent=1 // pred_check_branch
      %113 = sbr.rel (0) target = $region73
    $region72: #{hcl_forward.1} parent=1 // pred_region
      %114 = dma.done [#allocation6], 2048
    $region73: #{hcl_forward.1} parent=1 // pred_fallthru
      _
    // Predicated region
    $region74: #{hcl_forward.1} parent=1 // pred_check
      _
    $region75: #{hcl_forward.1} parent=1 // pred_check_branch
      %116 = sbr.rel (0) target = $region77
    $region76: #{hcl_forward.1} parent=1 // pred_region
      %117 = dma.done [#allocation6], 2048
    $region77: #{hcl_forward.1} parent=1 // pred_fallthru
      _
    // Predicated region
    $region78: #{hcl_forward.1} parent=1 // pred_check
      _
    $region79: #{hcl_forward.1} parent=1 // pred_check_branch
      %119 = sbr.rel (0) target = $region81
    $region80: #{hcl_forward.1} parent=1 // pred_region
      %120 = dma.done [#allocation9], 1024
    $region81: #{hcl_forward.1} parent=1 // pred_fallthru
      _
    // Predicated region
    $region82: #{hcl_forward.1} parent=1 // pred_check
      _
    $region83: #{hcl_forward.1} parent=1 // pred_check_branch
      %122 = sbr.rel (0) target = $region85
    $region84: #{hcl_forward.1} parent=1 // pred_region
      %123 = dma.done [#allocation9], 1024
    $region85: #{hcl_forward.1} parent=1 // pred_fallthru
      _
    %v125 = vld [vmem:[%s0] sm:$0xf]
    %v126 = vld [vmem:[%s0 + $0x4] sm:$0xf]
    %v127 = vld [vmem:[%s1] sm:$0xff]
    %v128 = vld [vmem:[%s1 + $0x8] sm:$0xff]
    %v129 = vld [vmem:[%s10] sm:$0x1]
    %v130 = vld [vmem:[%s11] sm:$0x1]
    %v131 = vpack.c.bf16 %v128, %v127
    %v134 = vunpack.c.l.b16 %v125
    %v135 = vunpack.c.l.b16 %v126
    %v136 = vpack.c.b16 %v135, %v134
    %vm137 = vcmask 130048
    %v139 = vsel %vm137, %v136, 0
    %141 = vmatprep.subr.bf16.mxu0 0
    %142 = vmatpush1.bf16.msra.mxu0 %v131
    %143 = vmatprep.subr.bf16.mxu0 0
    %144 = vmatpush1.bf16.msra.mxu0 0
    %145 = vmatprep.subr.bf16.mxu0 0
    %146 = vmatpush1.bf16.msra.mxu0 0
    %147 = vmatprep.subr.bf16.mxu0 0
    %148 = vmatpush1.bf16.msra.mxu0 0
    %149 = vmatprep.subr.bf16.mxu0 0
    %150 = vmatpush1.bf16.msra.mxu0 0
    %151 = vmatprep.subr.bf16.mxu0 0
    %152 = vmatpush1.bf16.msra.mxu0 0
    %153 = vmatprep.subr.bf16.mxu0 0
    %154 = vmatpush1.bf16.msra.mxu0 0
    %155 = vmatprep.subr.bf16.mxu0 0
    %156 = vmatpush1.bf16.msra.mxu0 0
    %157 = vmatprep.subr.bf16.mxu0 0
    %158 = vmatpush1.bf16.msra.mxu0 0
    %159 = vmatprep.subr.bf16.mxu0 0
    %160 = vmatpush1.bf16.msra.mxu0 0
    %161 = vmatprep.subr.bf16.mxu0 0
    %162 = vmatpush1.bf16.msra.mxu0 0
    %163 = vmatprep.subr.bf16.mxu0 0
    %164 = vmatpush1.bf16.msra.mxu0 0
    %165 = vmatprep.subr.bf16.mxu0 0
    %166 = vmatpush1.bf16.msra.mxu0 0
    %167 = vmatprep.subr.bf16.mxu0 0
    %168 = vmatpush1.bf16.msra.mxu0 0
    %169 = vmatprep.subr.bf16.mxu0 0
    %170 = vmatpush1.bf16.msra.mxu0 0
    %171 = vmatprep.subr.bf16.mxu0 0
    %172 = vmatpush1.bf16.msra.mxu0 0
    %173 = vmatprep.mubr.bf16.mxu0 0
    %174 = vmatmul.mubr.bf16.gmra.mrb[0].mxu0 %v139
    %v175 = vpop.f32.mrb[0].mxu0
    %v176 = vadd.f32 0.0, %v175
    %v177 = vpop.f32.mrb[0].mxu0
    %v178 = vpop.f32.mrb[0].mxu0
    %v179 = vadd.f32 0.0, %v178
    %v180 = vpop.f32.mrb[0].mxu0
    %181 = vdwg.mxu0
    %v182 = vpack.c.bf16 %v179, %v176
    %v183 = vld [vmem:[#allocation2] sm:$0xff]
    %v184 = vld [vmem:[#allocation2 + $0x8] sm:$0xf]
    %v185 = vld [vmem:[#allocation2 + $0xc] sm:$0xff]
    %v186 = vld [vmem:[#allocation2 + $0x14] sm:$0xf]
    %v187 = vld [vmem:[#allocation2 + $0x18] sm:$0xff]
    %v188 = vld [vmem:[#allocation2 + $0x20] sm:$0xf]
    %v189 = vld [vmem:[#allocation2 + $0x24] sm:$0xff]
    %v190 = vld [vmem:[#allocation2 + $0x2c] sm:$0xf]
    %v191 = vld [vmem:[#allocation2 + $0x30] sm:$0xff]
    %v192 = vld [vmem:[#allocation2 + $0x38] sm:$0xf]
    %v193 = vld [vmem:[#allocation2 + $0x3c] sm:$0xff]
    %v194 = vld [vmem:[#allocation2 + $0x44] sm:$0xf]
    %v195 = vld [vmem:[#allocation2 + $0x48] sm:$0xff]
    %v196 = vld [vmem:[#allocation2 + $0x50] sm:$0xf]
    %v197 = vld [vmem:[#allocation2 + $0x54] sm:$0xff]
    %v198 = vld [vmem:[#allocation2 + $0x5c] sm:$0xf]
    %v199 = vld [vmem:[#allocation2 + $0x60] sm:$0xff]
    %v200 = vld [vmem:[#allocation2 + $0x68] sm:$0xf]
    %v201 = vld [vmem:[#allocation2 + $0x6c] sm:$0xff]
    %v202 = vld [vmem:[#allocation2 + $0x74] sm:$0xf]
    %v203 = vld [vmem:[#allocation2 + $0x78] sm:$0xff]
    %v204 = vld [vmem:[#allocation2 + $0x80] sm:$0xf]
    %v205 = vld [vmem:[#allocation2 + $0x84] sm:$0xff]
    %v206 = vld [vmem:[#allocation2 + $0x8c] sm:$0xf]
    %v207 = vld [vmem:[#allocation2 + $0x90] sm:$0xff]
    %v208 = vld [vmem:[#allocation2 + $0x98] sm:$0xf]
    %v209 = vld [vmem:[#allocation2 + $0x9c] sm:$0xff]
    %v210 = vld [vmem:[#allocation2 + $0xa4] sm:$0xf]
    %v211 = vld [vmem:[#allocation2 + $0xa8] sm:$0xff]
    %v212 = vld [vmem:[#allocation2 + $0xb0] sm:$0xf]
    %v213 = vld [vmem:[#allocation2 + $0xb4] sm:$0xff]
    %v214 = vld [vmem:[#allocation2 + $0xbc] sm:$0xf]
    %v215 = vld [vmem:[%s3] sm:$0x7]
    %v217 = vlaneseq
    %v218 = vshrl.u32 %v217, 7
    %v219 = vsub.s32 0, %v218
    %v220 = vrot.slane %v215, %v219
    %v221 = vlaneseq
    %v222 = vshrl.u32 %v221, 7
    %v223 = vsub.s32 1, %v222
    %v224 = vrot.slane %v215, %v223
    %v225 = vlaneseq
    %v226 = vshrl.u32 %v225, 7
    %v227 = vsub.s32 2, %v226
    %v228 = vrot.slane %v215, %v227
    %v264 = vunpack.c.l.b16 %v183
    %v265 = vunpack.c.h.b16 %v183
    %v266 = vunpack.c.l.b16 %v184
    %v267 = vunpack.c.l.b16 %v185
    %v268 = vunpack.c.h.b16 %v185
    %v269 = vunpack.c.l.b16 %v186
    %v270 = vunpack.c.l.b16 %v187
    %v271 = vunpack.c.h.b16 %v187
    %v272 = vunpack.c.l.b16 %v188
    %v273 = vunpack.c.l.b16 %v189
    %v274 = vunpack.c.h.b16 %v189
    %v275 = vunpack.c.l.b16 %v190
    %v276 = vunpack.c.l.b16 %v191
    %v277 = vunpack.c.h.b16 %v191
    %v278 = vunpack.c.l.b16 %v192
    %v279 = vunpack.c.l.b16 %v193
    %v280 = vunpack.c.h.b16 %v193
    %v281 = vunpack.c.l.b16 %v194
    %v282 = vunpack.c.l.b16 %v195
    %v283 = vunpack.c.h.b16 %v195
    %v284 = vunpack.c.l.b16 %v196
    %v285 = vunpack.c.l.b16 %v197
    %v286 = vunpack.c.h.b16 %v197
    %v287 = vunpack.c.l.b16 %v198
    %v288 = vunpack.c.l.b16 %v199
    %v289 = vunpack.c.h.b16 %v199
    %v290 = vunpack.c.l.b16 %v200
    %v291 = vunpack.c.l.b16 %v201
    %v292 = vunpack.c.h.b16 %v201
    %v293 = vunpack.c.l.b16 %v202
    %v294 = vunpack.c.l.b16 %v203
    %v295 = vunpack.c.h.b16 %v203
    %v296 = vunpack.c.l.b16 %v204
    %v297 = vunpack.c.l.b16 %v205
    %v298 = vunpack.c.h.b16 %v205
    %v299 = vunpack.c.l.b16 %v206
    %v300 = vunpack.c.l.b16 %v207
    %v301 = vunpack.c.h.b16 %v207
    %v302 = vunpack.c.l.b16 %v208
    %v303 = vunpack.c.l.b16 %v209
    %v304 = vunpack.c.h.b16 %v209
    %v305 = vunpack.c.l.b16 %v210
    %v306 = vunpack.c.l.b16 %v211
    %v307 = vunpack.c.h.b16 %v211
    %v308 = vunpack.c.l.b16 %v212
    %v309 = vunpack.c.l.b16 %v213
    %v310 = vunpack.c.h.b16 %v213
    %v311 = vunpack.c.l.b16 %v214
    %v312 = vpack.c.b16 %v267, %v264
    %v313 = vpack.c.b16 %v268, %v265
    %v314 = vpack.c.b16 %v269, %v266
    %v315 = vpack.c.b16 %v273, %v270
    %v316 = vpack.c.b16 %v274, %v271
    %v317 = vpack.c.b16 %v275, %v272
    %v318 = vpack.c.b16 %v279, %v276
    %v319 = vpack.c.b16 %v280, %v277
    %v320 = vpack.c.b16 %v281, %v278
    %v321 = vpack.c.b16 %v285, %v282
    %v322 = vpack.c.b16 %v286, %v283
    %v323 = vpack.c.b16 %v287, %v284
    %v324 = vpack.c.b16 %v291, %v288
    %v325 = vpack.c.b16 %v292, %v289
    %v326 = vpack.c.b16 %v293, %v290
    %v327 = vpack.c.b16 %v297, %v294
    %v328 = vpack.c.b16 %v298, %v295
    %v329 = vpack.c.b16 %v299, %v296
    %v330 = vpack.c.b16 %v303, %v300
    %v331 = vpack.c.b16 %v304, %v301
    %v332 = vpack.c.b16 %v305, %v302
    %v333 = vpack.c.b16 %v309, %v306
    %v334 = vpack.c.b16 %v310, %v307
    %v335 = vpack.c.b16 %v311, %v308
    %360 = vmatprep.subr.bf16.mxu0 %v313
    %361 = vmatpush1.bf16.msra.mxu0 %v312
    %362 = vmatprep.subr.bf16.mxu0 %v316
    %363 = vmatpush1.bf16.msra.mxu0 %v315
    %364 = vmatprep.subr.bf16.mxu0 %v319
    %365 = vmatpush1.bf16.msra.mxu0 %v318
    %366 = vmatprep.subr.bf16.mxu0 %v322
    %367 = vmatpush1.bf16.msra.mxu0 %v321
    %368 = vmatprep.subr.bf16.mxu0 %v325
    %369 = vmatpush1.bf16.msra.mxu0 %v324
    %370 = vmatprep.subr.bf16.mxu0 %v328
    %371 = vmatpush1.bf16.msra.mxu0 %v327
    %372 = vmatprep.subr.bf16.mxu0 %v331
    %373 = vmatpush1.bf16.msra.mxu0 %v330
    %374 = vmatprep.subr.bf16.mxu0 %v334
    %375 = vmatpush1.bf16.msra.mxu0 %v333
    %376 = vmatprep.subr.bf16.mxu0 0
    %377 = vmatpush1.bf16.msra.mxu0 0
    %378 = vmatprep.subr.bf16.mxu0 0
    %379 = vmatpush1.bf16.msra.mxu0 0
    %380 = vmatprep.subr.bf16.mxu0 0
    %381 = vmatpush1.bf16.msra.mxu0 0
    %382 = vmatprep.subr.bf16.mxu0 0
    %383 = vmatpush1.bf16.msra.mxu0 0
    %384 = vmatprep.subr.bf16.mxu0 0
    %385 = vmatpush1.bf16.msra.mxu0 0
    %386 = vmatprep.subr.bf16.mxu0 0
    %387 = vmatpush1.bf16.msra.mxu0 0
    %388 = vmatprep.subr.bf16.mxu0 0
    %389 = vmatpush1.bf16.msra.mxu0 0
    %390 = vmatprep.subr.bf16.mxu0 0
    %391 = vmatpush1.bf16.msra.mxu0 0
    %392 = vmatprep.mubr.bf16.mxu0 0
    %393 = vmatmul.mubr.bf16.gmra.mrb[0].mxu0 %v182
    %v394 = vpop.f32.mrb[0].mxu0
    %v395 = vadd.f32 %v220, %v394
    %v396 = vpop.f32.mrb[0].mxu0
    %v397 = vadd.f32 %v224, %v396
    %v398 = vpop.f32.mrb[0].mxu0
    %v399 = vadd.f32 %v220, %v398
    %v400 = vpop.f32.mrb[0].mxu0
    %v401 = vadd.f32 %v224, %v400
    %402 = vdwg.mxu0
    %403 = vmatprep.subr.bf16.mxu0 0
    %404 = vmatpush1.bf16.msra.mxu0 %v314
    %405 = vmatprep.subr.bf16.mxu0 0
    %406 = vmatpush1.bf16.msra.mxu0 %v317
    %407 = vmatprep.subr.bf16.mxu0 0
    %408 = vmatpush1.bf16.msra.mxu0 %v320
    %409 = vmatprep.subr.bf16.mxu0 0
    %410 = vmatpush1.bf16.msra.mxu0 %v323
    %411 = vmatprep.subr.bf16.mxu0 0
    %412 = vmatpush1.bf16.msra.mxu0 %v326
    %413 = vmatprep.subr.bf16.mxu0 0
    %414 = vmatpush1.bf16.msra.mxu0 %v329
    %415 = vmatprep.subr.bf16.mxu0 0
    %416 = vmatpush1.bf16.msra.mxu0 %v332
    %417 = vmatprep.subr.bf16.mxu0 0
    %418 = vmatpush1.bf16.msra.mxu0 %v335
    %419 = vmatprep.subr.bf16.mxu0 0
    %420 = vmatpush1.bf16.msra.mxu0 0
    %421 = vmatprep.subr.bf16.mxu0 0
    %422 = vmatpush1.bf16.msra.mxu0 0
    %423 = vmatprep.subr.bf16.mxu0 0
    %424 = vmatpush1.bf16.msra.mxu0 0
    %425 = vmatprep.subr.bf16.mxu0 0
    %426 = vmatpush1.bf16.msra.mxu0 0
    %427 = vmatprep.subr.bf16.mxu0 0
    %428 = vmatpush1.bf16.msra.mxu0 0
    %429 = vmatprep.subr.bf16.mxu0 0
    %430 = vmatpush1.bf16.msra.mxu0 0
    %431 = vmatprep.subr.bf16.mxu0 0
    %432 = vmatpush1.bf16.msra.mxu0 0
    %433 = vmatprep.subr.bf16.mxu0 0
    %434 = vmatpush1.bf16.msra.mxu0 0
    %435 = vmatprep.mubr.bf16.mxu0 0
    %436 = vmatmul.mubr.bf16.gmra.mrb[0].mxu0 %v182
    %v437 = vpop.f32.mrb[0].mxu0
    %v438 = vadd.f32 %v228, %v437
    %v439 = vpop.f32.mrb[0].mxu0
    %v440 = vpop.f32.mrb[0].mxu0
    %v441 = vadd.f32 %v228, %v440
    %v442 = vpop.f32.mrb[0].mxu0
    %443 = vdwg.mxu0
    %v444 = vpack.c.bf16 %v399, %v395
    %v445 = vpack.c.bf16 %v401, %v397
    %446 = vmatprep.subr.bf16.mxu0 0
    %447 = vmatpush1.bf16.xpose.msra.mxu0 %v445
    %448 = vmatprep.subr.bf16.mxu0 0
    %449 = vmatpush1.bf16.xpose.msra.mxu0 0
    %450 = vmatprep.subr.bf16.mxu0 0
    %451 = vmatpush1.bf16.xpose.msra.mxu0 0
    %452 = vmatprep.subr.bf16.mxu0 0
    %453 = vmatpush1.bf16.xpose.msra.mxu0 0
    %454 = vmatprep.subr.bf16.mxu0 0
    %455 = vmatpush1.bf16.xpose.msra.mxu0 0
    %456 = vmatprep.subr.bf16.mxu0 0
    %457 = vmatpush1.bf16.xpose.msra.mxu0 0
    %458 = vmatprep.subr.bf16.mxu0 0
    %459 = vmatpush1.bf16.xpose.msra.mxu0 0
    %460 = vmatprep.subr.bf16.mxu0 0
    %461 = vmatpush1.bf16.xpose.msra.mxu0 0
    %462 = vmatprep.subr.bf16.mxu0 0
    %463 = vmatpush1.bf16.xpose.msra.mxu0 0
    %464 = vmatprep.subr.bf16.mxu0 0
    %465 = vmatpush1.bf16.xpose.msra.mxu0 0
    %466 = vmatprep.subr.bf16.mxu0 0
    %467 = vmatpush1.bf16.xpose.msra.mxu0 0
    %468 = vmatprep.subr.bf16.mxu0 0
    %469 = vmatpush1.bf16.xpose.msra.mxu0 0
    %470 = vmatprep.subr.bf16.mxu0 0
    %471 = vmatpush1.bf16.xpose.msra.mxu0 0
    %472 = vmatprep.subr.bf16.mxu0 0
    %473 = vmatpush1.bf16.xpose.msra.mxu0 0
    %474 = vmatprep.subr.bf16.mxu0 0
    %475 = vmatpush1.bf16.xpose.msra.mxu0 0
    %476 = vmatprep.subr.bf16.mxu0 0
    %477 = vmatpush1.bf16.xpose.msra.mxu0 0
    %478 = vmatprep.mubr.bf16.mxu0 0
    %479 = vmatmul.mubr.bf16.gmra.mrb[0].mxu0 %v444
    %v480 = vpop.f32.mrb[0].mxu0
    %v481 = vadd.f32 0.0, %v480
    %v482 = vpop.f32.mrb[0].mxu0
    %v483 = vpop.f32.mrb[0].mxu0
    %v484 = vadd.f32 0.0, %v483
    %v485 = vpop.f32.mrb[0].mxu0
    %486 = vdwg.mxu0
    %v487 = vsel %vm137, %v481, -inf
    %488 = vmax.xlane.f32.xlu0 %v487
    %v489 = vpop.xlane.xlu0 %488
    %v490 = vsel %vm137, %v484, -inf
    %491 = vmax.xlane.f32.xlu0 %v490
    %v492 = vpop.xlane.xlu0 %491
    %v493 = vsub.f32 %v481, %v489
    %v494 = vsub.f32 %v484, %v492
    %v495 = vmul.f32 %v493, 1.442695
    %v496 = vpow.pop %v495
    %v497 = vmul.f32 %v494, 1.442695
    %v498 = vpow.pop %v497
    %v499 = vsel %vm137, %v496, 0.0
    %500 = vadd.xlane.f32.xlu0 %v499
    %v501 = vpop.xlane.xlu0 %500
    %v502 = vsel %vm137, %v498, 0.0
    %503 = vadd.xlane.f32.xlu0 %v502
    %v504 = vpop.xlane.xlu0 %503
    %v505 = vrcp.pop %v501
    %v506 = vrcp.pop %v504
    %v507 = vmul.f32 %v496, %v505
    %v508 = vmul.f32 %v498, %v506
    %v509 = vpack.c.bf16 %v508, %v507
    %v510 = vpack.c.bf16 %v441, %v438
    %v512 = vsel %vm137, %v509, 0
    %514 = vmatprep.subr.bf16.mxu0 0
    %515 = vmatpush1.bf16.msra.mxu0 %v510
    %516 = vmatprep.subr.bf16.mxu0 0
    %517 = vmatpush1.bf16.msra.mxu0 0
    %518 = vmatprep.subr.bf16.mxu0 0
    %519 = vmatpush1.bf16.msra.mxu0 0
    %520 = vmatprep.subr.bf16.mxu0 0
    %521 = vmatpush1.bf16.msra.mxu0 0
    %522 = vmatprep.subr.bf16.mxu0 0
    %523 = vmatpush1.bf16.msra.mxu0 0
    %524 = vmatprep.subr.bf16.mxu0 0
    %525 = vmatpush1.bf16.msra.mxu0 0
    %526 = vmatprep.subr.bf16.mxu0 0
    %527 = vmatpush1.bf16.msra.mxu0 0
    %528 = vmatprep.subr.bf16.mxu0 0
    %529 = vmatpush1.bf16.msra.mxu0 0
    %530 = vmatprep.subr.bf16.mxu0 0
    %531 = vmatpush1.bf16.msra.mxu0 0
    %532 = vmatprep.subr.bf16.mxu0 0
    %533 = vmatpush1.bf16.msra.mxu0 0
    %534 = vmatprep.subr.bf16.mxu0 0
    %535 = vmatpush1.bf16.msra.mxu0 0
    %536 = vmatprep.subr.bf16.mxu0 0
    %537 = vmatpush1.bf16.msra.mxu0 0
    %538 = vmatprep.subr.bf16.mxu0 0
    %539 = vmatpush1.bf16.msra.mxu0 0
    %540 = vmatprep.subr.bf16.mxu0 0
    %541 = vmatpush1.bf16.msra.mxu0 0
    %542 = vmatprep.subr.bf16.mxu0 0
    %543 = vmatpush1.bf16.msra.mxu0 0
    %544 = vmatprep.subr.bf16.mxu0 0
    %545 = vmatpush1.bf16.msra.mxu0 0
    %546 = vmatprep.mubr.bf16.mxu0 0
    %547 = vmatmul.mubr.bf16.gmra.mrb[0].mxu0 %v512
    %v548 = vpop.f32.mrb[0].mxu0
    %v549 = vadd.f32 0.0, %v548
    %v550 = vpop.f32.mrb[0].mxu0
    %v551 = vpop.f32.mrb[0].mxu0
    %v552 = vadd.f32 0.0, %v551
    %v553 = vpop.f32.mrb[0].mxu0
    %554 = vdwg.mxu0
    %v555 = vld [vmem:[%s4] sm:$0xf]
    %v556 = vld [vmem:[%s4 + $0x4] sm:$0xf]
    %v557 = vld [vmem:[%s4 + $0x8] sm:$0xf]
    %v558 = vld [vmem:[%s4 + $0xc] sm:$0xf]
    %v559 = vld [vmem:[%s4 + $0x10] sm:$0xf]
    %v560 = vld [vmem:[%s4 + $0x14] sm:$0xf]
    %v561 = vld [vmem:[%s4 + $0x18] sm:$0xf]
    %v562 = vld [vmem:[%s4 + $0x1c] sm:$0xf]
    %v563 = vld [vmem:[%s4 + $0x20] sm:$0xf]
    %v564 = vld [vmem:[%s4 + $0x24] sm:$0xf]
    %v565 = vld [vmem:[%s4 + $0x28] sm:$0xf]
    %v566 = vld [vmem:[%s4 + $0x2c] sm:$0xf]
    %v567 = vld [vmem:[%s4 + $0x30] sm:$0xf]
    %v568 = vld [vmem:[%s4 + $0x34] sm:$0xf]
    %v569 = vld [vmem:[%s4 + $0x38] sm:$0xf]
    %v570 = vld [vmem:[%s4 + $0x3c] sm:$0xf]
    %v571 = vld [vmem:[%s5] sm:$0x1]
    %v572 = vpack.c.bf16 %v552, %v549
    %v589 = vunpack.c.l.b16 %v555
    %v590 = vunpack.c.l.b16 %v556
    %v591 = vunpack.c.l.b16 %v557
    %v592 = vunpack.c.l.b16 %v558
    %v593 = vunpack.c.l.b16 %v559
    %v594 = vunpack.c.l.b16 %v560
    %v595 = vunpack.c.l.b16 %v561
    %v596 = vunpack.c.l.b16 %v562
    %v597 = vunpack.c.l.b16 %v563
    %v598 = vunpack.c.l.b16 %v564
    %v599 = vunpack.c.l.b16 %v565
    %v600 = vunpack.c.l.b16 %v566
    %v601 = vunpack.c.l.b16 %v567
    %v602 = vunpack.c.l.b16 %v568
    %v603 = vunpack.c.l.b16 %v569
    %v604 = vunpack.c.l.b16 %v570
    %v605 = vpack.c.b16 %v590, %v589
    %v606 = vpack.c.b16 %v592, %v591
    %v607 = vpack.c.b16 %v594, %v593
    %v608 = vpack.c.b16 %v596, %v595
    %v609 = vpack.c.b16 %v598, %v597
    %v610 = vpack.c.b16 %v600, %v599
    %v611 = vpack.c.b16 %v602, %v601
    %v612 = vpack.c.b16 %v604, %v603
    %621 = vmatprep.subr.bf16.mxu0 0
    %622 = vmatpush1.bf16.msra.mxu0 %v605
    %623 = vmatprep.subr.bf16.mxu0 0
    %624 = vmatpush1.bf16.msra.mxu0 %v606
    %625 = vmatprep.subr.bf16.mxu0 0
    %626 = vmatpush1.bf16.msra.mxu0 %v607
    %627 = vmatprep.subr.bf16.mxu0 0
    %628 = vmatpush1.bf16.msra.mxu0 %v608
    %629 = vmatprep.subr.bf16.mxu0 0
    %630 = vmatpush1.bf16.msra.mxu0 %v609
    %631 = vmatprep.subr.bf16.mxu0 0
    %632 = vmatpush1.bf16.msra.mxu0 %v610
    %633 = vmatprep.subr.bf16.mxu0 0
    %634 = vmatpush1.bf16.msra.mxu0 %v611
    %635 = vmatprep.subr.bf16.mxu0 0
    %636 = vmatpush1.bf16.msra.mxu0 %v612
    %637 = vmatprep.subr.bf16.mxu0 0
    %638 = vmatpush1.bf16.msra.mxu0 0
    %639 = vmatprep.subr.bf16.mxu0 0
    %640 = vmatpush1.bf16.msra.mxu0 0
    %641 = vmatprep.subr.bf16.mxu0 0
    %642 = vmatpush1.bf16.msra.mxu0 0
    %643 = vmatprep.subr.bf16.mxu0 0
    %644 = vmatpush1.bf16.msra.mxu0 0
    %645 = vmatprep.subr.bf16.mxu0 0
    %646 = vmatpush1.bf16.msra.mxu0 0
    %647 = vmatprep.subr.bf16.mxu0 0
    %648 = vmatpush1.bf16.msra.mxu0 0
    %649 = vmatprep.subr.bf16.mxu0 0
    %650 = vmatpush1.bf16.msra.mxu0 0
    %651 = vmatprep.subr.bf16.mxu0 0
    %652 = vmatpush1.bf16.msra.mxu0 0
    %653 = vmatprep.mubr.bf16.mxu0 0
    %654 = vmatmul.mubr.bf16.gmra.mrb[0].mxu0 %v572
    %v655 = vpop.f32.mrb[0].mxu0
    %v656 = vadd.f32 0.0, %v655
    %v657 = vpop.f32.mrb[0].mxu0
    %v658 = vpop.f32.mrb[0].mxu0
    %v659 = vadd.f32 0.0, %v658
    %v660 = vpop.f32.mrb[0].mxu0
    %661 = vdwg.mxu0
    %v662 = vpack.c.bf16 %v659, %v656
    %v664 = vlaneseq
    %v665 = vshrl.u32 %v664, 7
    %v666 = vsub.s32 0, %v665
    %v667 = vrot.slane %v571, %v666
    %669 = vmatprep.subr.bf16.mxu0 0
    %670 = vmatpush1.bf16.msra.mxu0 %v662
    %671 = vmatprep.subr.bf16.mxu0 0
    %672 = vmatpush1.bf16.msra.mxu0 0
    %673 = vmatprep.subr.bf16.mxu0 0
    %674 = vmatpush1.bf16.msra.mxu0 0
    %675 = vmatprep.subr.bf16.mxu0 0
    %676 = vmatpush1.bf16.msra.mxu0 0
    %677 = vmatprep.subr.bf16.mxu0 0
    %678 = vmatpush1.bf16.msra.mxu0 0
    %679 = vmatprep.subr.bf16.mxu0 0
    %680 = vmatpush1.bf16.msra.mxu0 0
    %681 = vmatprep.subr.bf16.mxu0 0
    %682 = vmatpush1.bf16.msra.mxu0 0
    %683 = vmatprep.subr.bf16.mxu0 0
    %684 = vmatpush1.bf16.msra.mxu0 0
    %685 = vmatprep.subr.bf16.mxu0 0
    %686 = vmatpush1.bf16.msra.mxu0 0
    %687 = vmatprep.subr.bf16.mxu0 0
    %688 = vmatpush1.bf16.msra.mxu0 0
    %689 = vmatprep.subr.bf16.mxu0 0
    %690 = vmatpush1.bf16.msra.mxu0 0
    %691 = vmatprep.subr.bf16.mxu0 0
    %692 = vmatpush1.bf16.msra.mxu0 0
    %693 = vmatprep.subr.bf16.mxu0 0
    %694 = vmatpush1.bf16.msra.mxu0 0
    %695 = vmatprep.subr.bf16.mxu0 0
    %696 = vmatpush1.bf16.msra.mxu0 0
    %697 = vmatprep.subr.bf16.mxu0 0
    %698 = vmatpush1.bf16.msra.mxu0 0
    %699 = vmatprep.subr.bf16.mxu0 0
    %700 = vmatpush1.bf16.msra.mxu0 0
    %701 = vmatprep.mubr.bf16.mxu0 0
    %702 = vmatmul.mubr.bf16.gmra.mrb[0].mxu0 %v139
    %v703 = vpop.f32.mrb[0].mxu0
    %v704 = vadd.f32 %v667, %v703
    %v705 = vpop.f32.mrb[0].mxu0
    %v706 = vpop.f32.mrb[0].mxu0
    %v707 = vadd.f32 %v667, %v706
    %v708 = vpop.f32.mrb[0].mxu0
    %709 = vdwg.mxu0
    %710 = vadd.xlane.f32.xlu0 %v704
    %v711 = vpop.xlane.xlu0 %710
    %712 = vadd.xlane.f32.xlu0 %v707
    %v713 = vpop.xlane.xlu0 %712
    %v714 = vmul.f32 %v711, 0.03125
    %v715 = vmul.f32 %v713, 0.03125
    %v716 = vmul.f32 %v704, %v704
    %v717 = vmul.f32 %v707, %v707
    %718 = vadd.xlane.f32.xlu0 %v716
    %v719 = vpop.xlane.xlu0 %718
    %720 = vadd.xlane.f32.xlu0 %v717
    %v721 = vpop.xlane.xlu0 %720
    %v722 = vmul.f32 %v719, 0.03125
    %v723 = vmul.f32 %v721, 0.03125
    %v724 = vmul.f32 %v714, %v714
    %v725 = vmul.f32 %v715, %v715
    %v726 = vsub.f32 %v722, %v724
    %v727 = vsub.f32 %v723, %v725
    %v728 = vsub.f32 %v704, %v714
    %v729 = vsub.f32 %v707, %v715
    %v730 = vadd.f32 %v726, 1e-05
    %v731 = vadd.f32 %v727, 1e-05
    %v732 = vrsqrt.pop %v730
    %v733 = vrsqrt.pop %v731
    %v734 = vmul.f32 %v728, %v732
    %v735 = vmul.f32 %v729, %v733
    %v737 = vlaneseq
    %v738 = vshrl.u32 %v737, 7
    %v739 = vsub.s32 0, %v738
    %v740 = vrot.slane %v129, %v739
    %v742 = vmul.f32 %v734, %v740
    %v743 = vmul.f32 %v735, %v740
    %v745 = vlaneseq
    %v746 = vshrl.u32 %v745, 7
    %v747 = vsub.s32 0, %v746
    %v748 = vrot.slane %v130, %v747
    %v750 = vadd.f32 %v742, %v748
    %v751 = vadd.f32 %v743, %v748
    %v752 = vadd.f32 %v750, %v127
    %v753 = vadd.f32 %v751, %v128
    %v754 = vld [vmem:[#allocation5] sm:$0xf]
    %v755 = vld [vmem:[#allocation5 + $0x4] sm:$0xf]
    %v756 = vld [vmem:[#allocation5 + $0x8] sm:$0xf]
    %v757 = vld [vmem:[#allocation5 + $0xc] sm:$0xf]
    %v758 = vld [vmem:[#allocation5 + $0x10] sm:$0xf]
    %v759 = vld [vmem:[#allocation5 + $0x14] sm:$0xf]
    %v760 = vld [vmem:[#allocation5 + $0x18] sm:$0xf]
    %v761 = vld [vmem:[#allocation5 + $0x1c] sm:$0xf]
    %v762 = vld [vmem:[#allocation5 + $0x20] sm:$0xf]
    %v763 = vld [vmem:[#allocation5 + $0x24] sm:$0xf]
    %v764 = vld [vmem:[#allocation5 + $0x28] sm:$0xf]
    %v765 = vld [vmem:[#allocation5 + $0x2c] sm:$0xf]
    %v766 = vld [vmem:[#allocation5 + $0x30] sm:$0xf]
    %v767 = vld [vmem:[#allocation5 + $0x34] sm:$0xf]
    %v768 = vld [vmem:[#allocation5 + $0x38] sm:$0xf]
    %v769 = vld [vmem:[#allocation5 + $0x3c] sm:$0xf]
    %v770 = vld [vmem:[%s7] sm:$0x1]
    %v771 = vpack.c.bf16 %v753, %v752
    %v788 = vunpack.c.l.b16 %v754
    %v789 = vunpack.c.l.b16 %v755
    %v790 = vunpack.c.l.b16 %v756
    %v791 = vunpack.c.l.b16 %v757
    %v792 = vunpack.c.l.b16 %v758
    %v793 = vunpack.c.l.b16 %v759
    %v794 = vunpack.c.l.b16 %v760
    %v795 = vunpack.c.l.b16 %v761
    %v796 = vunpack.c.l.b16 %v762
    %v797 = vunpack.c.l.b16 %v763
    %v798 = vunpack.c.l.b16 %v764
    %v799 = vunpack.c.l.b16 %v765
    %v800 = vunpack.c.l.b16 %v766
    %v801 = vunpack.c.l.b16 %v767
    %v802 = vunpack.c.l.b16 %v768
    %v803 = vunpack.c.l.b16 %v769
    %v804 = vpack.c.b16 %v789, %v788
    %v805 = vpack.c.b16 %v791, %v790
    %v806 = vpack.c.b16 %v793, %v792
    %v807 = vpack.c.b16 %v795, %v794
    %v808 = vpack.c.b16 %v797, %v796
    %v809 = vpack.c.b16 %v799, %v798
    %v810 = vpack.c.b16 %v801, %v800
    %v811 = vpack.c.b16 %v803, %v802
    %820 = vmatprep.subr.bf16.mxu0 0
    %821 = vmatpush1.bf16.msra.mxu0 %v804
    %822 = vmatprep.subr.bf16.mxu0 0
    %823 = vmatpush1.bf16.msra.mxu0 %v805
    %824 = vmatprep.subr.bf16.mxu0 0
    %825 = vmatpush1.bf16.msra.mxu0 %v806
    %826 = vmatprep.subr.bf16.mxu0 0
    %827 = vmatpush1.bf16.msra.mxu0 %v807
    %828 = vmatprep.subr.bf16.mxu0 0
    %829 = vmatpush1.bf16.msra.mxu0 %v808
    %830 = vmatprep.subr.bf16.mxu0 0
    %831 = vmatpush1.bf16.msra.mxu0 %v809
    %832 = vmatprep.subr.bf16.mxu0 0
    %833 = vmatpush1.bf16.msra.mxu0 %v810
    %834 = vmatprep.subr.bf16.mxu0 0
    %835 = vmatpush1.bf16.msra.mxu0 %v811
    %836 = vmatprep.subr.bf16.mxu0 0
    %837 = vmatpush1.bf16.msra.mxu0 0
    %838 = vmatprep.subr.bf16.mxu0 0
    %839 = vmatpush1.bf16.msra.mxu0 0
    %840 = vmatprep.subr.bf16.mxu0 0
    %841 = vmatpush1.bf16.msra.mxu0 0
    %842 = vmatprep.subr.bf16.mxu0 0
    %843 = vmatpush1.bf16.msra.mxu0 0
    %844 = vmatprep.subr.bf16.mxu0 0
    %845 = vmatpush1.bf16.msra.mxu0 0
    %846 = vmatprep.subr.bf16.mxu0 0
    %847 = vmatpush1.bf16.msra.mxu0 0
    %848 = vmatprep.subr.bf16.mxu0 0
    %849 = vmatpush1.bf16.msra.mxu0 0
    %850 = vmatprep.subr.bf16.mxu0 0
    %851 = vmatpush1.bf16.msra.mxu0 0
    %852 = vmatprep.mubr.bf16.mxu0 0
    %853 = vmatmul.mubr.bf16.gmra.mrb[0].mxu0 %v771
    %v854 = vpop.f32.mrb[0].mxu0
    %v855 = vadd.f32 0.0, %v854
    %v856 = vpop.f32.mrb[0].mxu0
    %v857 = vpop.f32.mrb[0].mxu0
    %v858 = vadd.f32 0.0, %v857
    %v859 = vpop.f32.mrb[0].mxu0
    %860 = vdwg.mxu0
    %v861 = vpack.c.bf16 %v858, %v855
    %v863 = vlaneseq
    %v864 = vshrl.u32 %v863, 7
    %v865 = vsub.s32 0, %v864
    %v866 = vrot.slane %v770, %v865
    %868 = vmatprep.subr.bf16.mxu0 0
    %869 = vmatpush1.bf16.msra.mxu0 %v861
    %870 = vmatprep.subr.bf16.mxu0 0
    %871 = vmatpush1.bf16.msra.mxu0 0
    %872 = vmatprep.subr.bf16.mxu0 0
    %873 = vmatpush1.bf16.msra.mxu0 0
    %874 = vmatprep.subr.bf16.mxu0 0
    %875 = vmatpush1.bf16.msra.mxu0 0
    %876 = vmatprep.subr.bf16.mxu0 0
    %877 = vmatpush1.bf16.msra.mxu0 0
    %878 = vmatprep.subr.bf16.mxu0 0
    %879 = vmatpush1.bf16.msra.mxu0 0
    %880 = vmatprep.subr.bf16.mxu0 0
    %881 = vmatpush1.bf16.msra.mxu0 0
    %882 = vmatprep.subr.bf16.mxu0 0
    %883 = vmatpush1.bf16.msra.mxu0 0
    %884 = vmatprep.subr.bf16.mxu0 0
    %885 = vmatpush1.bf16.msra.mxu0 0
    %886 = vmatprep.subr.bf16.mxu0 0
    %887 = vmatpush1.bf16.msra.mxu0 0
    %888 = vmatprep.subr.bf16.mxu0 0
    %889 = vmatpush1.bf16.msra.mxu0 0
    %890 = vmatprep.subr.bf16.mxu0 0
    %891 = vmatpush1.bf16.msra.mxu0 0
    %892 = vmatprep.subr.bf16.mxu0 0
    %893 = vmatpush1.bf16.msra.mxu0 0
    %894 = vmatprep.subr.bf16.mxu0 0
    %895 = vmatpush1.bf16.msra.mxu0 0
    %896 = vmatprep.subr.bf16.mxu0 0
    %897 = vmatpush1.bf16.msra.mxu0 0
    %898 = vmatprep.subr.bf16.mxu0 0
    %899 = vmatpush1.bf16.msra.mxu0 0
    %900 = vmatprep.mubr.bf16.mxu0 0
    %901 = vmatmul.mubr.bf16.gmra.mrb[0].mxu0 %v139
    %v902 = vpop.f32.mrb[0].mxu0
    %v903 = vadd.f32 %v866, %v902
    %v904 = vpop.f32.mrb[0].mxu0
    %v905 = vpop.f32.mrb[0].mxu0
    %v906 = vadd.f32 %v866, %v905
    %v907 = vpop.f32.mrb[0].mxu0
    %908 = vdwg.mxu0
    %v909 = vmax.f32 %v903, 0.0
    %v910 = vmax.f32 %v906, 0.0
    %v911 = vld [vmem:[#allocation7] sm:$0xf]
    %v912 = vld [vmem:[#allocation7 + $0x4] sm:$0xf]
    %v913 = vld [vmem:[#allocation7 + $0x8] sm:$0xf]
    %v914 = vld [vmem:[#allocation7 + $0xc] sm:$0xf]
    %v915 = vld [vmem:[#allocation7 + $0x10] sm:$0xf]
    %v916 = vld [vmem:[#allocation7 + $0x14] sm:$0xf]
    %v917 = vld [vmem:[#allocation7 + $0x18] sm:$0xf]
    %v918 = vld [vmem:[#allocation7 + $0x1c] sm:$0xf]
    %v919 = vld [vmem:[#allocation7 + $0x20] sm:$0xf]
    %v920 = vld [vmem:[#allocation7 + $0x24] sm:$0xf]
    %v921 = vld [vmem:[#allocation7 + $0x28] sm:$0xf]
    %v922 = vld [vmem:[#allocation7 + $0x2c] sm:$0xf]
    %v923 = vld [vmem:[#allocation7 + $0x30] sm:$0xf]
    %v924 = vld [vmem:[#allocation7 + $0x34] sm:$0xf]
    %v925 = vld [vmem:[#allocation7 + $0x38] sm:$0xf]
    %v926 = vld [vmem:[#allocation7 + $0x3c] sm:$0xf]
    %v927 = vld [vmem:[%s9] sm:$0x1]
    %v928 = vpack.c.bf16 %v910, %v909
    %v945 = vunpack.c.l.b16 %v911
    %v946 = vunpack.c.l.b16 %v912
    %v947 = vunpack.c.l.b16 %v913
    %v948 = vunpack.c.l.b16 %v914
    %v949 = vunpack.c.l.b16 %v915
    %v950 = vunpack.c.l.b16 %v916
    %v951 = vunpack.c.l.b16 %v917
    %v952 = vunpack.c.l.b16 %v918
    %v953 = vunpack.c.l.b16 %v919
    %v954 = vunpack.c.l.b16 %v920
    %v955 = vunpack.c.l.b16 %v921
    %v956 = vunpack.c.l.b16 %v922
    %v957 = vunpack.c.l.b16 %v923
    %v958 = vunpack.c.l.b16 %v924
    %v959 = vunpack.c.l.b16 %v925
    %v960 = vunpack.c.l.b16 %v926
    %v961 = vpack.c.b16 %v946, %v945
    %v962 = vpack.c.b16 %v948, %v947
    %v963 = vpack.c.b16 %v950, %v949
    %v964 = vpack.c.b16 %v952, %v951
    %v965 = vpack.c.b16 %v954, %v953
    %v966 = vpack.c.b16 %v956, %v955
    %v967 = vpack.c.b16 %v958, %v957
    %v968 = vpack.c.b16 %v960, %v959
    %977 = vmatprep.subr.bf16.mxu0 0
    %978 = vmatpush1.bf16.msra.mxu0 %v961
    %979 = vmatprep.subr.bf16.mxu0 0
    %980 = vmatpush1.bf16.msra.mxu0 %v962
    %981 = vmatprep.subr.bf16.mxu0 0
    %982 = vmatpush1.bf16.msra.mxu0 %v963
    %983 = vmatprep.subr.bf16.mxu0 0
    %984 = vmatpush1.bf16.msra.mxu0 %v964
    %985 = vmatprep.subr.bf16.mxu0 0
    %986 = vmatpush1.bf16.msra.mxu0 %v965
    %987 = vmatprep.subr.bf16.mxu0 0
    %988 = vmatpush1.bf16.msra.mxu0 %v966
    %989 = vmatprep.subr.bf16.mxu0 0
    %990 = vmatpush1.bf16.msra.mxu0 %v967
    %991 = vmatprep.subr.bf16.mxu0 0
    %992 = vmatpush1.bf16.msra.mxu0 %v968
    %993 = vmatprep.subr.bf16.mxu0 0
    %994 = vmatpush1.bf16.msra.mxu0 0
    %995 = vmatprep.subr.bf16.mxu0 0
    %996 = vmatpush1.bf16.msra.mxu0 0
    %997 = vmatprep.subr.bf16.mxu0 0
    %998 = vmatpush1.bf16.msra.mxu0 0
    %999 = vmatprep.subr.bf16.mxu0 0
    %1000 = vmatpush1.bf16.msra.mxu0 0
    %1001 = vmatprep.subr.bf16.mxu0 0
    %1002 = vmatpush1.bf16.msra.mxu0 0
    %1003 = vmatprep.subr.bf16.mxu0 0
    %1004 = vmatpush1.bf16.msra.mxu0 0
    %1005 = vmatprep.subr.bf16.mxu0 0
    %1006 = vmatpush1.bf16.msra.mxu0 0
    %1007 = vmatprep.subr.bf16.mxu0 0
    %1008 = vmatpush1.bf16.msra.mxu0 0
    %1009 = vmatprep.mubr.bf16.mxu0 0
    %1010 = vmatmul.mubr.bf16.gmra.mrb[0].mxu0 %v928
    %v1011 = vpop.f32.mrb[0].mxu0
    %v1012 = vadd.f32 0.0, %v1011
    %v1013 = vpop.f32.mrb[0].mxu0
    %v1014 = vpop.f32.mrb[0].mxu0
    %v1015 = vadd.f32 0.0, %v1014
    %v1016 = vpop.f32.mrb[0].mxu0
    %1017 = vdwg.mxu0
    %v1018 = vpack.c.bf16 %v1015, %v1012
    %v1020 = vlaneseq
    %v1021 = vshrl.u32 %v1020, 7
    %v1022 = vsub.s32 0, %v1021
    %v1023 = vrot.slane %v927, %v1022
    %1025 = vmatprep.subr.bf16.mxu0 0
    %1026 = vmatpush1.bf16.msra.mxu0 %v1018
    %1027 = vmatprep.subr.bf16.mxu0 0
    %1028 = vmatpush1.bf16.msra.mxu0 0
    %1029 = vmatprep.subr.bf16.mxu0 0
    %1030 = vmatpush1.bf16.msra.mxu0 0
    %1031 = vmatprep.subr.bf16.mxu0 0
    %1032 = vmatpush1.bf16.msra.mxu0 0
    %1033 = vmatprep.subr.bf16.mxu0 0
    %1034 = vmatpush1.bf16.msra.mxu0 0
    %1035 = vmatprep.subr.bf16.mxu0 0
    %1036 = vmatpush1.bf16.msra.mxu0 0
    %1037 = vmatprep.subr.bf16.mxu0 0
    %1038 = vmatpush1.bf16.msra.mxu0 0
    %1039 = vmatprep.subr.bf16.mxu0 0
    %1040 = vmatpush1.bf16.msra.mxu0 0
    %1041 = vmatprep.subr.bf16.mxu0 0
    %1042 = vmatpush1.bf16.msra.mxu0 0
    %1043 = vmatprep.subr.bf16.mxu0 0
    %1044 = vmatpush1.bf16.msra.mxu0 0
    %1045 = vmatprep.subr.bf16.mxu0 0
    %1046 = vmatpush1.bf16.msra.mxu0 0
    %1047 = vmatprep.subr.bf16.mxu0 0
    %1048 = vmatpush1.bf16.msra.mxu0 0
    %1049 = vmatprep.subr.bf16.mxu0 0
    %1050 = vmatpush1.bf16.msra.mxu0 0
    %1051 = vmatprep.subr.bf16.mxu0 0
    %1052 = vmatpush1.bf16.msra.mxu0 0
    %1053 = vmatprep.subr.bf16.mxu0 0
    %1054 = vmatpush1.bf16.msra.mxu0 0
    %1055 = vmatprep.subr.bf16.mxu0 0
    %1056 = vmatpush1.bf16.msra.mxu0 0
    %1057 = vmatprep.mubr.bf16.mxu0 0
    %1058 = vmatmul.mubr.bf16.gmra.mrb[0].mxu0 %v139
    %v1059 = vpop.f32.mrb[0].mxu0
    %v1060 = vadd.f32 %v1023, %v1059
    %v1061 = vpop.f32.mrb[0].mxu0
    %v1062 = vpop.f32.mrb[0].mxu0
    %v1063 = vadd.f32 %v1023, %v1062
    %v1064 = vpop.f32.mrb[0].mxu0
    %1065 = vdwg.mxu0
    %1066 = vadd.xlane.f32.xlu0 %v1060
    %v1067 = vpop.xlane.xlu0 %1066
    %1068 = vadd.xlane.f32.xlu0 %v1063
    %v1069 = vpop.xlane.xlu0 %1068
    %v1070 = vmul.f32 %v1067, 0.03125
    %v1071 = vmul.f32 %v1069, 0.03125
    %v1072 = vmul.f32 %v1060, %v1060
    %v1073 = vmul.f32 %v1063, %v1063
    %1074 = vadd.xlane.f32.xlu0 %v1072
    %v1075 = vpop.xlane.xlu0 %1074
    %1076 = vadd.xlane.f32.xlu0 %v1073
    %v1077 = vpop.xlane.xlu0 %1076
    %v1078 = vmul.f32 %v1075, 0.03125
    %v1079 = vmul.f32 %v1077, 0.03125
    %v1080 = vmul.f32 %v1070, %v1070
    %v1081 = vmul.f32 %v1071, %v1071
    %v1082 = vsub.f32 %v1078, %v1080
    %v1083 = vsub.f32 %v1079, %v1081
    %v1084 = vsub.f32 %v1060, %v1070
    %v1085 = vsub.f32 %v1063, %v1071
    %v1086 = vadd.f32 %v1082, 1e-05
    %v1087 = vadd.f32 %v1083, 1e-05
    %v1088 = vrsqrt.pop %v1086
    %v1089 = vrsqrt.pop %v1087
    %v1090 = vmul.f32 %v1084, %v1088
    %v1091 = vmul.f32 %v1085, %v1089
    %v1092 = vmul.f32 %v1090, %v740
    %v1093 = vmul.f32 %v1091, %v740
    %v1094 = vadd.f32 %v1092, %v748
    %v1095 = vadd.f32 %v1093, %v748
    %s1096 = scalar_lea.vmem %s10, 1
    %v1097 = vld [vmem:[%s1096] sm:$0x1]
    %s1098 = scalar_lea.vmem %s11, 1
    %v1099 = vld [vmem:[%s1098] sm:$0x1]
    %v1100 = vpack.c.bf16 %v1095, %v1094
    %1101 = vmatprep.subr.bf16.mxu0 0
    %1102 = vmatpush1.bf16.msra.mxu0 %v1100
    %1103 = vmatprep.subr.bf16.mxu0 0
    %1104 = vmatpush1.bf16.msra.mxu0 0
    %1105 = vmatprep.subr.bf16.mxu0 0
    %1106 = vmatpush1.bf16.msra.mxu0 0
    %1107 = vmatprep.subr.bf16.mxu0 0
    %1108 = vmatpush1.bf16.msra.mxu0 0
    %1109 = vmatprep.subr.bf16.mxu0 0
    %1110 = vmatpush1.bf16.msra.mxu0 0
    %1111 = vmatprep.subr.bf16.mxu0 0
    %1112 = vmatpush1.bf16.msra.mxu0 0
    %1113 = vmatprep.subr.bf16.mxu0 0
    %1114 = vmatpush1.bf16.msra.mxu0 0
    %1115 = vmatprep.subr.bf16.mxu0 0
    %1116 = vmatpush1.bf16.msra.mxu0 0
    %1117 = vmatprep.subr.bf16.mxu0 0
    %1118 = vmatpush1.bf16.msra.mxu0 0
    %1119 = vmatprep.subr.bf16.mxu0 0
    %1120 = vmatpush1.bf16.msra.mxu0 0
    %1121 = vmatprep.subr.bf16.mxu0 0
    %1122 = vmatpush1.bf16.msra.mxu0 0
    %1123 = vmatprep.subr.bf16.mxu0 0
    %1124 = vmatpush1.bf16.msra.mxu0 0
    %1125 = vmatprep.subr.bf16.mxu0 0
    %1126 = vmatpush1.bf16.msra.mxu0 0
    %1127 = vmatprep.subr.bf16.mxu0 0
    %1128 = vmatpush1.bf16.msra.mxu0 0
    %1129 = vmatprep.subr.bf16.mxu0 0
    %1130 = vmatpush1.bf16.msra.mxu0 0
    %1131 = vmatprep.subr.bf16.mxu0 0
    %1132 = vmatpush1.bf16.msra.mxu0 0
    %1133 = vmatprep.mubr.bf16.mxu0 0
    %1134 = vmatmul.mubr.bf16.gmra.mrb[0].mxu0 %v139
    %v1135 = vpop.f32.mrb[0].mxu0
    %v1136 = vadd.f32 0.0, %v1135
    %v1137 = vpop.f32.mrb[0].mxu0
    %v1138 = vpop.f32.mrb[0].mxu0
    %v1139 = vadd.f32 0.0, %v1138
    %v1140 = vpop.f32.mrb[0].mxu0
    %1141 = vdwg.mxu0
    %v1142 = vpack.c.bf16 %v1139, %v1136
    %s1143 = scalar_lea.vmem [#allocation2], 192
    %v1144 = vld [vmem:[%s1143] sm:$0xff]
    %v1145 = vld [vmem:[%s1143 + $0x8] sm:$0xf]
    %v1146 = vld [vmem:[%s1143 + $0xc] sm:$0xff]
    %v1147 = vld [vmem:[%s1143 + $0x14] sm:$0xf]
    %v1148 = vld [vmem:[%s1143 + $0x18] sm:$0xff]
    %v1149 = vld [vmem:[%s1143 + $0x20] sm:$0xf]
    %v1150 = vld [vmem:[%s1143 + $0x24] sm:$0xff]
    %v1151 = vld [vmem:[%s1143 + $0x2c] sm:$0xf]
    %v1152 = vld [vmem:[%s1143 + $0x30] sm:$0xff]
    %v1153 = vld [vmem:[%s1143 + $0x38] sm:$0xf]
    %v1154 = vld [vmem:[%s1143 + $0x3c] sm:$0xff]
    %v1155 = vld [vmem:[%s1143 + $0x44] sm:$0xf]
    %v1156 = vld [vmem:[%s1143 + $0x48] sm:$0xff]
    %v1157 = vld [vmem:[%s1143 + $0x50] sm:$0xf]
    %v1158 = vld [vmem:[%s1143 + $0x54] sm:$0xff]
    %v1159 = vld [vmem:[%s1143 + $0x5c] sm:$0xf]
    %v1160 = vld [vmem:[%s1143 + $0x60] sm:$0xff]
    %v1161 = vld [vmem:[%s1143 + $0x68] sm:$0xf]
    %v1162 = vld [vmem:[%s1143 + $0x6c] sm:$0xff]
    %v1163 = vld [vmem:[%s1143 + $0x74] sm:$0xf]
    %v1164 = vld [vmem:[%s1143 + $0x78] sm:$0xff]
    %v1165 = vld [vmem:[%s1143 + $0x80] sm:$0xf]
    %v1166 = vld [vmem:[%s1143 + $0x84] sm:$0xff]
    %v1167 = vld [vmem:[%s1143 + $0x8c] sm:$0xf]
    %v1168 = vld [vmem:[%s1143 + $0x90] sm:$0xff]
    %v1169 = vld [vmem:[%s1143 + $0x98] sm:$0xf]
    %v1170 = vld [vmem:[%s1143 + $0x9c] sm:$0xff]
    %v1171 = vld [vmem:[%s1143 + $0xa4] sm:$0xf]
    %v1172 = vld [vmem:[%s1143 + $0xa8] sm:$0xff]
    %v1173 = vld [vmem:[%s1143 + $0xb0] sm:$0xf]
    %v1174 = vld [vmem:[%s1143 + $0xb4] sm:$0xff]
    %v1175 = vld [vmem:[%s1143 + $0xbc] sm:$0xf]
    %s1176 = scalar_lea.vmem %s3, 3
    %v1177 = vld [vmem:[%s1176] sm:$0x7]
    %v1179 = vlaneseq
    %v1180 = vshrl.u32 %v1179, 7
    %v1181 = vsub.s32 0, %v1180
    %v1182 = vrot.slane %v1177, %v1181
    %v1183 = vlaneseq
    %v1184 = vshrl.u32 %v1183, 7
    %v1185 = vsub.s32 1, %v1184
    %v1186 = vrot.slane %v1177, %v1185
    %v1187 = vlaneseq
    %v1188 = vshrl.u32 %v1187, 7
    %v1189 = vsub.s32 2, %v1188
    %v1190 = vrot.slane %v1177, %v1189
    %v1226 = vunpack.c.l.b16 %v1144
    %v1227 = vunpack.c.h.b16 %v1144
    %v1228 = vunpack.c.l.b16 %v1145
    %v1229 = vunpack.c.l.b16 %v1146
    %v1230 = vunpack.c.h.b16 %v1146
    %v1231 = vunpack.c.l.b16 %v1147
    %v1232 = vunpack.c.l.b16 %v1148
    %v1233 = vunpack.c.h.b16 %v1148
    %v1234 = vunpack.c.l.b16 %v1149
    %v1235 = vunpack.c.l.b16 %v1150
    %v1236 = vunpack.c.h.b16 %v1150
    %v1237 = vunpack.c.l.b16 %v1151
    %v1238 = vunpack.c.l.b16 %v1152
    %v1239 = vunpack.c.h.b16 %v1152
    %v1240 = vunpack.c.l.b16 %v1153
    %v1241 = vunpack.c.l.b16 %v1154
    %v1242 = vunpack.c.h.b16 %v1154
    %v1243 = vunpack.c.l.b16 %v1155
    %v1244 = vunpack.c.l.b16 %v1156
    %v1245 = vunpack.c.h.b16 %v1156
    %v1246 = vunpack.c.l.b16 %v1157
    %v1247 = vunpack.c.l.b16 %v1158
    %v1248 = vunpack.c.h.b16 %v1158
    %v1249 = vunpack.c.l.b16 %v1159
    %v1250 = vunpack.c.l.b16 %v1160
    %v1251 = vunpack.c.h.b16 %v1160
    %v1252 = vunpack.c.l.b16 %v1161
    %v1253 = vunpack.c.l.b16 %v1162
    %v1254 = vunpack.c.h.b16 %v1162
    %v1255 = vunpack.c.l.b16 %v1163
    %v1256 = vunpack.c.l.b16 %v1164
    %v1257 = vunpack.c.h.b16 %v1164
    %v1258 = vunpack.c.l.b16 %v1165
    %v1259 = vunpack.c.l.b16 %v1166
    %v1260 = vunpack.c.h.b16 %v1166
    %v1261 = vunpack.c.l.b16 %v1167
    %v1262 = vunpack.c.l.b16 %v1168
    %v1263 = vunpack.c.h.b16 %v1168
    %v1264 = vunpack.c.l.b16 %v1169
    %v1265 = vunpack.c.l.b16 %v1170
    %v1266 = vunpack.c.h.b16 %v1170
    %v1267 = vunpack.c.l.b16 %v1171
    %v1268 = vunpack.c.l.b16 %v1172
    %v1269 = vunpack.c.h.b16 %v1172
    %v1270 = vunpack.c.l.b16 %v1173
    %v1271 = vunpack.c.l.b16 %v1174
    %v1272 = vunpack.c.h.b16 %v1174
    %v1273 = vunpack.c.l.b16 %v1175
    %v1274 = vpack.c.b16 %v1229, %v1226
    %v1275 = vpack.c.b16 %v1230, %v1227
    %v1276 = vpack.c.b16 %v1231, %v1228
    %v1277 = vpack.c.b16 %v1235, %v1232
    %v1278 = vpack.c.b16 %v1236, %v1233
    %v1279 = vpack.c.b16 %v1237, %v1234
    %v1280 = vpack.c.b16 %v1241, %v1238
    %v1281 = vpack.c.b16 %v1242, %v1239
    %v1282 = vpack.c.b16 %v1243, %v1240
    %v1283 = vpack.c.b16 %v1247, %v1244
    %v1284 = vpack.c.b16 %v1248, %v1245
    %v1285 = vpack.c.b16 %v1249, %v1246
    %v1286 = vpack.c.b16 %v1253, %v1250
    %v1287 = vpack.c.b16 %v1254, %v1251
    %v1288 = vpack.c.b16 %v1255, %v1252
    %v1289 = vpack.c.b16 %v1259, %v1256
    %v1290 = vpack.c.b16 %v1260, %v1257
    %v1291 = vpack.c.b16 %v1261, %v1258
    %v1292 = vpack.c.b16 %v1265, %v1262
    %v1293 = vpack.c.b16 %v1266, %v1263
    %v1294 = vpack.c.b16 %v1267, %v1264
    %v1295 = vpack.c.b16 %v1271, %v1268
    %v1296 = vpack.c.b16 %v1272, %v1269
    %v1297 = vpack.c.b16 %v1273, %v1270
    %1322 = vmatprep.subr.bf16.mxu0 %v1275
    %1323 = vmatpush1.bf16.msra.mxu0 %v1274
    %1324 = vmatprep.subr.bf16.mxu0 %v1278
    %1325 = vmatpush1.bf16.msra.mxu0 %v1277
    %1326 = vmatprep.subr.bf16.mxu0 %v1281
    %1327 = vmatpush1.bf16.msra.mxu0 %v1280
    %1328 = vmatprep.subr.bf16.mxu0 %v1284
    %1329 = vmatpush1.bf16.msra.mxu0 %v1283
    %1330 = vmatprep.subr.bf16.mxu0 %v1287
    %1331 = vmatpush1.bf16.msra.mxu0 %v1286
    %1332 = vmatprep.subr.bf16.mxu0 %v1290
    %1333 = vmatpush1.bf16.msra.mxu0 %v1289
    %1334 = vmatprep.subr.bf16.mxu0 %v1293
    %1335 = vmatpush1.bf16.msra.mxu0 %v1292
    %1336 = vmatprep.subr.bf16.mxu0 %v1296
    %1337 = vmatpush1.bf16.msra.mxu0 %v1295
    %1338 = vmatprep.subr.bf16.mxu0 0
    %1339 = vmatpush1.bf16.msra.mxu0 0
    %1340 = vmatprep.subr.bf16.mxu0 0
    %1341 = vmatpush1.bf16.msra.mxu0 0
    %1342 = vmatprep.subr.bf16.mxu0 0
    %1343 = vmatpush1.bf16.msra.mxu0 0
    %1344 = vmatprep.subr.bf16.mxu0 0
    %1345 = vmatpush1.bf16.msra.mxu0 0
    %1346 = vmatprep.subr.bf16.mxu0 0
    %1347 = vmatpush1.bf16.msra.mxu0 0
    %1348 = vmatprep.subr.bf16.mxu0 0
    %1349 = vmatpush1.bf16.msra.mxu0 0
    %1350 = vmatprep.subr.bf16.mxu0 0
    %1351 = vmatpush1.bf16.msra.mxu0 0
    %1352 = vmatprep.subr.bf16.mxu0 0
    %1353 = vmatpush1.bf16.msra.mxu0 0
    %1354 = vmatprep.mubr.bf16.mxu0 0
    %1355 = vmatmul.mubr.bf16.gmra.mrb[0].mxu0 %v1142
    %v1356 = vpop.f32.mrb[0].mxu0
    %v1357 = vadd.f32 %v1182, %v1356
    %v1358 = vpop.f32.mrb[0].mxu0
    %v1359 = vadd.f32 %v1186, %v1358
    %v1360 = vpop.f32.mrb[0].mxu0
    %v1361 = vadd.f32 %v1182, %v1360
    %v1362 = vpop.f32.mrb[0].mxu0
    %v1363 = vadd.f32 %v1186, %v1362
    %1364 = vdwg.mxu0
    %1365 = vmatprep.subr.bf16.mxu0 0
    %1366 = vmatpush1.bf16.msra.mxu0 %v1276
    %1367 = vmatprep.subr.bf16.mxu0 0
    %1368 = vmatpush1.bf16.msra.mxu0 %v1279
    %1369 = vmatprep.subr.bf16.mxu0 0
    %1370 = vmatpush1.bf16.msra.mxu0 %v1282
    %1371 = vmatprep.subr.bf16.mxu0 0
    %1372 = vmatpush1.bf16.msra.mxu0 %v1285
    %1373 = vmatprep.subr.bf16.mxu0 0
    %1374 = vmatpush1.bf16.msra.mxu0 %v1288
    %1375 = vmatprep.subr.bf16.mxu0 0
    %1376 = vmatpush1.bf16.msra.mxu0 %v1291
    %1377 = vmatprep.subr.bf16.mxu0 0
    %1378 = vmatpush1.bf16.msra.mxu0 %v1294
    %1379 = vmatprep.subr.bf16.mxu0 0
    %1380 = vmatpush1.bf16.msra.mxu0 %v1297
    %1381 = vmatprep.subr.bf16.mxu0 0
    %1382 = vmatpush1.bf16.msra.mxu0 0
    %1383 = vmatprep.subr.bf16.mxu0 0
    %1384 = vmatpush1.bf16.msra.mxu0 0
    %1385 = vmatprep.subr.bf16.mxu0 0
    %1386 = vmatpush1.bf16.msra.mxu0 0
    %1387 = vmatprep.subr.bf16.mxu0 0
    %1388 = vmatpush1.bf16.msra.mxu0 0
    %1389 = vmatprep.subr.bf16.mxu0 0
    %1390 = vmatpush1.bf16.msra.mxu0 0
    %1391 = vmatprep.subr.bf16.mxu0 0
    %1392 = vmatpush1.bf16.msra.mxu0 0
    %1393 = vmatprep.subr.bf16.mxu0 0
    %1394 = vmatpush1.bf16.msra.mxu0 0
    %1395 = vmatprep.subr.bf16.mxu0 0
    %1396 = vmatpush1.bf16.msra.mxu0 0
    %1397 = vmatprep.mubr.bf16.mxu0 0
    %1398 = vmatmul.mubr.bf16.gmra.mrb[0].mxu0 %v1142
    %v1399 = vpop.f32.mrb[0].mxu0
    %v1400 = vadd.f32 %v1190, %v1399
    %v1401 = vpop.f32.mrb[0].mxu0
    %v1402 = vpop.f32.mrb[0].mxu0
    %v1403 = vadd.f32 %v1190, %v1402
    %v1404 = vpop.f32.mrb[0].mxu0
    %1405 = vdwg.mxu0
    %v1406 = vpack.c.bf16 %v1361, %v1357
    %v1407 = vpack.c.bf16 %v1363, %v1359
    %v1408 = vunpack.c.l.bf16 %v509
    %v1409 = vunpack.c.h.bf16 %v509
    %1410 = vmatprep.subr.bf16.mxu0 0
    %1411 = vmatpush1.bf16.xpose.msra.mxu0 %v1407
    %1412 = vmatprep.subr.bf16.mxu0 0
    %1413 = vmatpush1.bf16.xpose.msra.mxu0 0
    %1414 = vmatprep.subr.bf16.mxu0 0
    %1415 = vmatpush1.bf16.xpose.msra.mxu0 0
    %1416 = vmatprep.subr.bf16.mxu0 0
    %1417 = vmatpush1.bf16.xpose.msra.mxu0 0
    %1418 = vmatprep.subr.bf16.mxu0 0
    %1419 = vmatpush1.bf16.xpose.msra.mxu0 0
    %1420 = vmatprep.subr.bf16.mxu0 0
    %1421 = vmatpush1.bf16.xpose.msra.mxu0 0
    %1422 = vmatprep.subr.bf16.mxu0 0
    %1423 = vmatpush1.bf16.xpose.msra.mxu0 0
    %1424 = vmatprep.subr.bf16.mxu0 0
    %1425 = vmatpush1.bf16.xpose.msra.mxu0 0
    %1426 = vmatprep.subr.bf16.mxu0 0
    %1427 = vmatpush1.bf16.xpose.msra.mxu0 0
    %1428 = vmatprep.subr.bf16.mxu0 0
    %1429 = vmatpush1.bf16.xpose.msra.mxu0 0
    %1430 = vmatprep.subr.bf16.mxu0 0
    %1431 = vmatpush1.bf16.xpose.msra.mxu0 0
    %1432 = vmatprep.subr.bf16.mxu0 0
    %1433 = vmatpush1.bf16.xpose.msra.mxu0 0
    %1434 = vmatprep.subr.bf16.mxu0 0
    %1435 = vmatpush1.bf16.xpose.msra.mxu0 0
    %1436 = vmatprep.subr.bf16.mxu0 0
    %1437 = vmatpush1.bf16.xpose.msra.mxu0 0
    %1438 = vmatprep.subr.bf16.mxu0 0
    %1439 = vmatpush1.bf16.xpose.msra.mxu0 0
    %1440 = vmatprep.subr.bf16.mxu0 0
    %1441 = vmatpush1.bf16.xpose.msra.mxu0 0
    %1442 = vmatprep.mubr.bf16.mxu0 0
    %1443 = vmatmul.mubr.bf16.gmra.mrb[0].mxu0 %v1406
    %v1444 = vpop.f32.mrb[0].mxu0
    %v1445 = vadd.f32 %v1408, %v1444
    %v1446 = vpop.f32.mrb[0].mxu0
    %v1447 = vpop.f32.mrb[0].mxu0
    %v1448 = vadd.f32 %v1409, %v1447
    %v1449 = vpop.f32.mrb[0].mxu0
    %1450 = vdwg.mxu0
    %v1451 = vsel %vm137, %v1445, -inf
    %1452 = vmax.xlane.f32.xlu0 %v1451
    %v1453 = vpop.xlane.xlu0 %1452
    %v1454 = vsel %vm137, %v1448, -inf
    %1455 = vmax.xlane.f32.xlu0 %v1454
    %v1456 = vpop.xlane.xlu0 %1455
    %v1457 = vsub.f32 %v1445, %v1453
    %v1458 = vsub.f32 %v1448, %v1456
    %v1459 = vmul.f32 %v1457, 1.442695
    %v1460 = vpow.pop %v1459
    %v1461 = vmul.f32 %v1458, 1.442695
    %v1462 = vpow.pop %v1461
    %v1463 = vsel %vm137, %v1460, 0.0
    %1464 = vadd.xlane.f32.xlu0 %v1463
    %v1465 = vpop.xlane.xlu0 %1464
    %v1466 = vsel %vm137, %v1462, 0.0
    %1467 = vadd.xlane.f32.xlu0 %v1466
    %v1468 = vpop.xlane.xlu0 %1467
    %v1469 = vrcp.pop %v1465
    %v1470 = vrcp.pop %v1468
    %v1471 = vmul.f32 %v1460, %v1469
    %v1472 = vmul.f32 %v1462, %v1470
    %v1473 = vpack.c.bf16 %v1472, %v1471
    %v1474 = vpack.c.bf16 %v1403, %v1400
    %v1476 = vsel %vm137, %v1473, 0
    %1478 = vmatprep.subr.bf16.mxu0 0
    %1479 = vmatpush1.bf16.msra.mxu0 %v1474
    %1480 = vmatprep.subr.bf16.mxu0 0
    %1481 = vmatpush1.bf16.msra.mxu0 0
    %1482 = vmatprep.subr.bf16.mxu0 0
    %1483 = vmatpush1.bf16.msra.mxu0 0
    %1484 = vmatprep.subr.bf16.mxu0 0
    %1485 = vmatpush1.bf16.msra.mxu0 0
    %1486 = vmatprep.subr.bf16.mxu0 0
    %1487 = vmatpush1.bf16.msra.mxu0 0
    %1488 = vmatprep.subr.bf16.mxu0 0
    %1489 = vmatpush1.bf16.msra.mxu0 0
    %1490 = vmatprep.subr.bf16.mxu0 0
    %1491 = vmatpush1.bf16.msra.mxu0 0
    %1492 = vmatprep.subr.bf16.mxu0 0
    %1493 = vmatpush1.bf16.msra.mxu0 0
    %1494 = vmatprep.subr.bf16.mxu0 0
    %1495 = vmatpush1.bf16.msra.mxu0 0
    %1496 = vmatprep.subr.bf16.mxu0 0
    %1497 = vmatpush1.bf16.msra.mxu0 0
    %1498 = vmatprep.subr.bf16.mxu0 0
    %1499 = vmatpush1.bf16.msra.mxu0 0
    %1500 = vmatprep.subr.bf16.mxu0 0
    %1501 = vmatpush1.bf16.msra.mxu0 0
    %1502 = vmatprep.subr.bf16.mxu0 0
    %1503 = vmatpush1.bf16.msra.mxu0 0
    %1504 = vmatprep.subr.bf16.mxu0 0
    %1505 = vmatpush1.bf16.msra.mxu0 0
    %1506 = vmatprep.subr.bf16.mxu0 0
    %1507 = vmatpush1.bf16.msra.mxu0 0
    %1508 = vmatprep.subr.bf16.mxu0 0
    %1509 = vmatpush1.bf16.msra.mxu0 0
    %1510 = vmatprep.mubr.bf16.mxu0 0
    %1511 = vmatmul.mubr.bf16.gmra.mrb[0].mxu0 %v1476
    %v1512 = vpop.f32.mrb[0].mxu0
    %v1513 = vadd.f32 0.0, %v1512
    %v1514 = vpop.f32.mrb[0].mxu0
    %v1515 = vpop.f32.mrb[0].mxu0
    %v1516 = vadd.f32 0.0, %v1515
    %v1517 = vpop.f32.mrb[0].mxu0
    %1518 = vdwg.mxu0
    %s1519 = scalar_lea.vmem %s4, 64
    %v1520 = vld [vmem:[%s1519] sm:$0xf]
    %v1521 = vld [vmem:[%s1519 + $0x4] sm:$0xf]
    %v1522 = vld [vmem:[%s1519 + $0x8] sm:$0xf]
    %v1523 = vld [vmem:[%s1519 + $0xc] sm:$0xf]
    %v1524 = vld [vmem:[%s1519 + $0x10] sm:$0xf]
    %v1525 = vld [vmem:[%s1519 + $0x14] sm:$0xf]
    %v1526 = vld [vmem:[%s1519 + $0x18] sm:$0xf]
    %v1527 = vld [vmem:[%s1519 + $0x1c] sm:$0xf]
    %v1528 = vld [vmem:[%s1519 + $0x20] sm:$0xf]
    %v1529 = vld [vmem:[%s1519 + $0x24] sm:$0xf]
    %v1530 = vld [vmem:[%s1519 + $0x28] sm:$0xf]
    %v1531 = vld [vmem:[%s1519 + $0x2c] sm:$0xf]
    %v1532 = vld [vmem:[%s1519 + $0x30] sm:$0xf]
    %v1533 = vld [vmem:[%s1519 + $0x34] sm:$0xf]
    %v1534 = vld [vmem:[%s1519 + $0x38] sm:$0xf]
    %v1535 = vld [vmem:[%s1519 + $0x3c] sm:$0xf]
    %s1536 = scalar_lea.vmem %s5, 1
    %v1537 = vld [vmem:[%s1536] sm:$0x1]
    %v1538 = vpack.c.bf16 %v1516, %v1513
    %v1555 = vunpack.c.l.b16 %v1520
    %v1556 = vunpack.c.l.b16 %v1521
    %v1557 = vunpack.c.l.b16 %v1522
    %v1558 = vunpack.c.l.b16 %v1523
    %v1559 = vunpack.c.l.b16 %v1524
    %v1560 = vunpack.c.l.b16 %v1525
    %v1561 = vunpack.c.l.b16 %v1526
    %v1562 = vunpack.c.l.b16 %v1527
    %v1563 = vunpack.c.l.b16 %v1528
    %v1564 = vunpack.c.l.b16 %v1529
    %v1565 = vunpack.c.l.b16 %v1530
    %v1566 = vunpack.c.l.b16 %v1531
    %v1567 = vunpack.c.l.b16 %v1532
    %v1568 = vunpack.c.l.b16 %v1533
    %v1569 = vunpack.c.l.b16 %v1534
    %v1570 = vunpack.c.l.b16 %v1535
    %v1571 = vpack.c.b16 %v1556, %v1555
    %v1572 = vpack.c.b16 %v1558, %v1557
    %v1573 = vpack.c.b16 %v1560, %v1559
    %v1574 = vpack.c.b16 %v1562, %v1561
    %v1575 = vpack.c.b16 %v1564, %v1563
    %v1576 = vpack.c.b16 %v1566, %v1565
    %v1577 = vpack.c.b16 %v1568, %v1567
    %v1578 = vpack.c.b16 %v1570, %v1569
    %1587 = vmatprep.subr.bf16.mxu0 0
    %1588 = vmatpush1.bf16.msra.mxu0 %v1571
    %1589 = vmatprep.subr.bf16.mxu0 0
    %1590 = vmatpush1.bf16.msra.mxu0 %v1572
    %1591 = vmatprep.subr.bf16.mxu0 0
    %1592 = vmatpush1.bf16.msra.mxu0 %v1573
    %1593 = vmatprep.subr.bf16.mxu0 0
    %1594 = vmatpush1.bf16.msra.mxu0 %v1574
    %1595 = vmatprep.subr.bf16.mxu0 0
    %1596 = vmatpush1.bf16.msra.mxu0 %v1575
    %1597 = vmatprep.subr.bf16.mxu0 0
    %1598 = vmatpush1.bf16.msra.mxu0 %v1576
    %1599 = vmatprep.subr.bf16.mxu0 0
    %1600 = vmatpush1.bf16.msra.mxu0 %v1577
    %1601 = vmatprep.subr.bf16.mxu0 0
    %1602 = vmatpush1.bf16.msra.mxu0 %v1578
    %1603 = vmatprep.subr.bf16.mxu0 0
    %1604 = vmatpush1.bf16.msra.mxu0 0
    %1605 = vmatprep.subr.bf16.mxu0 0
    %1606 = vmatpush1.bf16.msra.mxu0 0
    %1607 = vmatprep.subr.bf16.mxu0 0
    %1608 = vmatpush1.bf16.msra.mxu0 0
    %1609 = vmatprep.subr.bf16.mxu0 0
    %1610 = vmatpush1.bf16.msra.mxu0 0
    %1611 = vmatprep.subr.bf16.mxu0 0
    %1612 = vmatpush1.bf16.msra.mxu0 0
    %1613 = vmatprep.subr.bf16.mxu0 0
    %1614 = vmatpush1.bf16.msra.mxu0 0
    %1615 = vmatprep.subr.bf16.mxu0 0
    %1616 = vmatpush1.bf16.msra.mxu0 0
    %1617 = vmatprep.subr.bf16.mxu0 0
    %1618 = vmatpush1.bf16.msra.mxu0 0
    %1619 = vmatprep.mubr.bf16.mxu0 0
    %1620 = vmatmul.mubr.bf16.gmra.mrb[0].mxu0 %v1538
    %v1621 = vpop.f32.mrb[0].mxu0
    %v1622 = vadd.f32 0.0, %v1621
    %v1623 = vpop.f32.mrb[0].mxu0
    %v1624 = vpop.f32.mrb[0].mxu0
    %v1625 = vadd.f32 0.0, %v1624
    %v1626 = vpop.f32.mrb[0].mxu0
    %1627 = vdwg.mxu0
    %v1628 = vpack.c.bf16 %v1625, %v1622
    %v1630 = vlaneseq
    %v1631 = vshrl.u32 %v1630, 7
    %v1632 = vsub.s32 0, %v1631
    %v1633 = vrot.slane %v1537, %v1632
    %1635 = vmatprep.subr.bf16.mxu0 0
    %1636 = vmatpush1.bf16.msra.mxu0 %v1628
    %1637 = vmatprep.subr.bf16.mxu0 0
    %1638 = vmatpush1.bf16.msra.mxu0 0
    %1639 = vmatprep.subr.bf16.mxu0 0
    %1640 = vmatpush1.bf16.msra.mxu0 0
    %1641 = vmatprep.subr.bf16.mxu0 0
    %1642 = vmatpush1.bf16.msra.mxu0 0
    %1643 = vmatprep.subr.bf16.mxu0 0
    %1644 = vmatpush1.bf16.msra.mxu0 0
    %1645 = vmatprep.subr.bf16.mxu0 0
    %1646 = vmatpush1.bf16.msra.mxu0 0
    %1647 = vmatprep.subr.bf16.mxu0 0
    %1648 = vmatpush1.bf16.msra.mxu0 0
    %1649 = vmatprep.subr.bf16.mxu0 0
    %1650 = vmatpush1.bf16.msra.mxu0 0
    %1651 = vmatprep.subr.bf16.mxu0 0
    %1652 = vmatpush1.bf16.msra.mxu0 0
    %1653 = vmatprep.subr.bf16.mxu0 0
    %1654 = vmatpush1.bf16.msra.mxu0 0
    %1655 = vmatprep.subr.bf16.mxu0 0
    %1656 = vmatpush1.bf16.msra.mxu0 0
    %1657 = vmatprep.subr.bf16.mxu0 0
    %1658 = vmatpush1.bf16.msra.mxu0 0
    %1659 = vmatprep.subr.bf16.mxu0 0
    %1660 = vmatpush1.bf16.msra.mxu0 0
    %1661 = vmatprep.subr.bf16.mxu0 0
    %1662 = vmatpush1.bf16.msra.mxu0 0
    %1663 = vmatprep.subr.bf16.mxu0 0
    %1664 = vmatpush1.bf16.msra.mxu0 0
    %1665 = vmatprep.subr.bf16.mxu0 0
    %1666 = vmatpush1.bf16.msra.mxu0 0
    %1667 = vmatprep.mubr.bf16.mxu0 0
    %1668 = vmatmul.mubr.bf16.gmra.mrb[0].mxu0 %v139
    %v1669 = vpop.f32.mrb[0].mxu0
    %v1670 = vadd.f32 %v1633, %v1669
    %v1671 = vpop.f32.mrb[0].mxu0
    %v1672 = vpop.f32.mrb[0].mxu0
    %v1673 = vadd.f32 %v1633, %v1672
    %v1674 = vpop.f32.mrb[0].mxu0
    %1675 = vdwg.mxu0
    %1676 = vadd.xlane.f32.xlu0 %v1670
    %v1677 = vpop.xlane.xlu0 %1676
    %1678 = vadd.xlane.f32.xlu0 %v1673
    %v1679 = vpop.xlane.xlu0 %1678
    %v1680 = vmul.f32 %v1677, 0.03125
    %v1681 = vmul.f32 %v1679, 0.03125
    %v1682 = vmul.f32 %v1670, %v1670
    %v1683 = vmul.f32 %v1673, %v1673
    %1684 = vadd.xlane.f32.xlu0 %v1682
    %v1685 = vpop.xlane.xlu0 %1684
    %1686 = vadd.xlane.f32.xlu0 %v1683
    %v1687 = vpop.xlane.xlu0 %1686
    %v1688 = vmul.f32 %v1685, 0.03125
    %v1689 = vmul.f32 %v1687, 0.03125
    %v1690 = vmul.f32 %v1680, %v1680
    %v1691 = vmul.f32 %v1681, %v1681
    %v1692 = vsub.f32 %v1688, %v1690
    %v1693 = vsub.f32 %v1689, %v1691
    %v1694 = vsub.f32 %v1670, %v1680
    %v1695 = vsub.f32 %v1673, %v1681
    %v1696 = vadd.f32 %v1692, 1e-05
    %v1697 = vadd.f32 %v1693, 1e-05
    %v1698 = vrsqrt.pop %v1696
    %v1699 = vrsqrt.pop %v1697
    %v1700 = vmul.f32 %v1694, %v1698
    %v1701 = vmul.f32 %v1695, %v1699
    %v1703 = vlaneseq
    %v1704 = vshrl.u32 %v1703, 7
    %v1705 = vsub.s32 0, %v1704
    %v1706 = vrot.slane %v1097, %v1705
    %v1708 = vmul.f32 %v1700, %v1706
    %v1709 = vmul.f32 %v1701, %v1706
    %v1711 = vlaneseq
    %v1712 = vshrl.u32 %v1711, 7
    %v1713 = vsub.s32 0, %v1712
    %v1714 = vrot.slane %v1099, %v1713
    %v1716 = vadd.f32 %v1708, %v1714
    %v1717 = vadd.f32 %v1709, %v1714
    %v1718 = vadd.f32 %v1716, %v1094
    %v1719 = vadd.f32 %v1717, %v1095
    %s1720 = scalar_lea.vmem [#allocation5], 64
    %v1721 = vld [vmem:[%s1720] sm:$0xf]
    %v1722 = vld [vmem:[%s1720 + $0x4] sm:$0xf]
    %v1723 = vld [vmem:[%s1720 + $0x8] sm:$0xf]
    %v1724 = vld [vmem:[%s1720 + $0xc] sm:$0xf]
    %v1725 = vld [vmem:[%s1720 + $0x10] sm:$0xf]
    %v1726 = vld [vmem:[%s1720 + $0x14] sm:$0xf]
    %v1727 = vld [vmem:[%s1720 + $0x18] sm:$0xf]
    %v1728 = vld [vmem:[%s1720 + $0x1c] sm:$0xf]
    %v1729 = vld [vmem:[%s1720 + $0x20] sm:$0xf]
    %v1730 = vld [vmem:[%s1720 + $0x24] sm:$0xf]
    %v1731 = vld [vmem:[%s1720 + $0x28] sm:$0xf]
    %v1732 = vld [vmem:[%s1720 + $0x2c] sm:$0xf]
    %v1733 = vld [vmem:[%s1720 + $0x30] sm:$0xf]
    %v1734 = vld [vmem:[%s1720 + $0x34] sm:$0xf]
    %v1735 = vld [vmem:[%s1720 + $0x38] sm:$0xf]
    %v1736 = vld [vmem:[%s1720 + $0x3c] sm:$0xf]
    %s1737 = scalar_lea.vmem %s7, 1
    %v1738 = vld [vmem:[%s1737] sm:$0x1]
    %v1739 = vpack.c.bf16 %v1719, %v1718
    %v1756 = vunpack.c.l.b16 %v1721
    %v1757 = vunpack.c.l.b16 %v1722
    %v1758 = vunpack.c.l.b16 %v1723
    %v1759 = vunpack.c.l.b16 %v1724
    %v1760 = vunpack.c.l.b16 %v1725
    %v1761 = vunpack.c.l.b16 %v1726
    %v1762 = vunpack.c.l.b16 %v1727
    %v1763 = vunpack.c.l.b16 %v1728
    %v1764 = vunpack.c.l.b16 %v1729
    %v1765 = vunpack.c.l.b16 %v1730
    %v1766 = vunpack.c.l.b16 %v1731
    %v1767 = vunpack.c.l.b16 %v1732
    %v1768 = vunpack.c.l.b16 %v1733
    %v1769 = vunpack.c.l.b16 %v1734
    %v1770 = vunpack.c.l.b16 %v1735
    %v1771 = vunpack.c.l.b16 %v1736
    %v1772 = vpack.c.b16 %v1757, %v1756
    %v1773 = vpack.c.b16 %v1759, %v1758
    %v1774 = vpack.c.b16 %v1761, %v1760
    %v1775 = vpack.c.b16 %v1763, %v1762
    %v1776 = vpack.c.b16 %v1765, %v1764
    %v1777 = vpack.c.b16 %v1767, %v1766
    %v1778 = vpack.c.b16 %v1769, %v1768
    %v1779 = vpack.c.b16 %v1771, %v1770
    %1788 = vmatprep.subr.bf16.mxu0 0
    %1789 = vmatpush1.bf16.msra.mxu0 %v1772
    %1790 = vmatprep.subr.bf16.mxu0 0
    %1791 = vmatpush1.bf16.msra.mxu0 %v1773
    %1792 = vmatprep.subr.bf16.mxu0 0
    %1793 = vmatpush1.bf16.msra.mxu0 %v1774
    %1794 = vmatprep.subr.bf16.mxu0 0
    %1795 = vmatpush1.bf16.msra.mxu0 %v1775
    %1796 = vmatprep.subr.bf16.mxu0 0
    %1797 = vmatpush1.bf16.msra.mxu0 %v1776
    %1798 = vmatprep.subr.bf16.mxu0 0
    %1799 = vmatpush1.bf16.msra.mxu0 %v1777
    %1800 = vmatprep.subr.bf16.mxu0 0
    %1801 = vmatpush1.bf16.msra.mxu0 %v1778
    %1802 = vmatprep.subr.bf16.mxu0 0
    %1803 = vmatpush1.bf16.msra.mxu0 %v1779
    %1804 = vmatprep.subr.bf16.mxu0 0
    %1805 = vmatpush1.bf16.msra.mxu0 0
    %1806 = vmatprep.subr.bf16.mxu0 0
    %1807 = vmatpush1.bf16.msra.mxu0 0
    %1808 = vmatprep.subr.bf16.mxu0 0
    %1809 = vmatpush1.bf16.msra.mxu0 0
    %1810 = vmatprep.subr.bf16.mxu0 0
    %1811 = vmatpush1.bf16.msra.mxu0 0
    %1812 = vmatprep.subr.bf16.mxu0 0
    %1813 = vmatpush1.bf16.msra.mxu0 0
    %1814 = vmatprep.subr.bf16.mxu0 0
    %1815 = vmatpush1.bf16.msra.mxu0 0
    %1816 = vmatprep.subr.bf16.mxu0 0
    %1817 = vmatpush1.bf16.msra.mxu0 0
    %1818 = vmatprep.subr.bf16.mxu0 0
    %1819 = vmatpush1.bf16.msra.mxu0 0
    %1820 = vmatprep.mubr.bf16.mxu0 0
    %1821 = vmatmul.mubr.bf16.gmra.mrb[0].mxu0 %v1739
    %v1822 = vpop.f32.mrb[0].mxu0
    %v1823 = vadd.f32 0.0, %v1822
    %v1824 = vpop.f32.mrb[0].mxu0
    %v1825 = vpop.f32.mrb[0].mxu0
    %v1826 = vadd.f32 0.0, %v1825
    %v1827 = vpop.f32.mrb[0].mxu0
    %1828 = vdwg.mxu0
    %v1829 = vpack.c.bf16 %v1826, %v1823
    %v1831 = vlaneseq
    %v1832 = vshrl.u32 %v1831, 7
    %v1833 = vsub.s32 0, %v1832
    %v1834 = vrot.slane %v1738, %v1833
    %1836 = vmatprep.subr.bf16.mxu0 0
    %1837 = vmatpush1.bf16.msra.mxu0 %v1829
    %1838 = vmatprep.subr.bf16.mxu0 0
    %1839 = vmatpush1.bf16.msra.mxu0 0
    %1840 = vmatprep.subr.bf16.mxu0 0
    %1841 = vmatpush1.bf16.msra.mxu0 0
    %1842 = vmatprep.subr.bf16.mxu0 0
    %1843 = vmatpush1.bf16.msra.mxu0 0
    %1844 = vmatprep.subr.bf16.mxu0 0
    %1845 = vmatpush1.bf16.msra.mxu0 0
    %1846 = vmatprep.subr.bf16.mxu0 0
    %1847 = vmatpush1.bf16.msra.mxu0 0
    %1848 = vmatprep.subr.bf16.mxu0 0
    %1849 = vmatpush1.bf16.msra.mxu0 0
    %1850 = vmatprep.subr.bf16.mxu0 0
    %1851 = vmatpush1.bf16.msra.mxu0 0
    %1852 = vmatprep.subr.bf16.mxu0 0
    %1853 = vmatpush1.bf16.msra.mxu0 0
    %1854 = vmatprep.subr.bf16.mxu0 0
    %1855 = vmatpush1.bf16.msra.mxu0 0
    %1856 = vmatprep.subr.bf16.mxu0 0
    %1857 = vmatpush1.bf16.msra.mxu0 0
    %1858 = vmatprep.subr.bf16.mxu0 0
    %1859 = vmatpush1.bf16.msra.mxu0 0
    %1860 = vmatprep.subr.bf16.mxu0 0
    %1861 = vmatpush1.bf16.msra.mxu0 0
    %1862 = vmatprep.subr.bf16.mxu0 0
    %1863 = vmatpush1.bf16.msra.mxu0 0
    %1864 = vmatprep.subr.bf16.mxu0 0
    %1865 = vmatpush1.bf16.msra.mxu0 0
    %1866 = vmatprep.subr.bf16.mxu0 0
    %1867 = vmatpush1.bf16.msra.mxu0 0
    %1868 = vmatprep.mubr.bf16.mxu0 0
    %1869 = vmatmul.mubr.bf16.gmra.mrb[0].mxu0 %v139
    %v1870 = vpop.f32.mrb[0].mxu0
    %v1871 = vadd.f32 %v1834, %v1870
    %v1872 = vpop.f32.mrb[0].mxu0
    %v1873 = vpop.f32.mrb[0].mxu0
    %v1874 = vadd.f32 %v1834, %v1873
    %v1875 = vpop.f32.mrb[0].mxu0
    %1876 = vdwg.mxu0
    %v1877 = vmax.f32 %v1871, 0.0
    %v1878 = vmax.f32 %v1874, 0.0
    %s1879 = scalar_lea.vmem [#allocation7], 64
    %v1880 = vld [vmem:[%s1879] sm:$0xf]
    %v1881 = vld [vmem:[%s1879 + $0x4] sm:$0xf]
    %v1882 = vld [vmem:[%s1879 + $0x8] sm:$0xf]
    %v1883 = vld [vmem:[%s1879 + $0xc] sm:$0xf]
    %v1884 = vld [vmem:[%s1879 + $0x10] sm:$0xf]
    %v1885 = vld [vmem:[%s1879 + $0x14] sm:$0xf]
    %v1886 = vld [vmem:[%s1879 + $0x18] sm:$0xf]
    %v1887 = vld [vmem:[%s1879 + $0x1c] sm:$0xf]
    %v1888 = vld [vmem:[%s1879 + $0x20] sm:$0xf]
    %v1889 = vld [vmem:[%s1879 + $0x24] sm:$0xf]
    %v1890 = vld [vmem:[%s1879 + $0x28] sm:$0xf]
    %v1891 = vld [vmem:[%s1879 + $0x2c] sm:$0xf]
    %v1892 = vld [vmem:[%s1879 + $0x30] sm:$0xf]
    %v1893 = vld [vmem:[%s1879 + $0x34] sm:$0xf]
    %v1894 = vld [vmem:[%s1879 + $0x38] sm:$0xf]
    %v1895 = vld [vmem:[%s1879 + $0x3c] sm:$0xf]
    %s1896 = scalar_lea.vmem %s9, 1
    %v1897 = vld [vmem:[%s1896] sm:$0x1]
    %v1898 = vpack.c.bf16 %v1878, %v1877
    %v1915 = vunpack.c.l.b16 %v1880
    %v1916 = vunpack.c.l.b16 %v1881
    %v1917 = vunpack.c.l.b16 %v1882
    %v1918 = vunpack.c.l.b16 %v1883
    %v1919 = vunpack.c.l.b16 %v1884
    %v1920 = vunpack.c.l.b16 %v1885
    %v1921 = vunpack.c.l.b16 %v1886
    %v1922 = vunpack.c.l.b16 %v1887
    %v1923 = vunpack.c.l.b16 %v1888
    %v1924 = vunpack.c.l.b16 %v1889
    %v1925 = vunpack.c.l.b16 %v1890
    %v1926 = vunpack.c.l.b16 %v1891
    %v1927 = vunpack.c.l.b16 %v1892
    %v1928 = vunpack.c.l.b16 %v1893
    %v1929 = vunpack.c.l.b16 %v1894
    %v1930 = vunpack.c.l.b16 %v1895
    %v1931 = vpack.c.b16 %v1916, %v1915
    %v1932 = vpack.c.b16 %v1918, %v1917
    %v1933 = vpack.c.b16 %v1920, %v1919
    %v1934 = vpack.c.b16 %v1922, %v1921
    %v1935 = vpack.c.b16 %v1924, %v1923
    %v1936 = vpack.c.b16 %v1926, %v1925
    %v1937 = vpack.c.b16 %v1928, %v1927
    %v1938 = vpack.c.b16 %v1930, %v1929
    %1947 = vmatprep.subr.bf16.mxu0 0
    %1948 = vmatpush1.bf16.msra.mxu0 %v1931
    %1949 = vmatprep.subr.bf16.mxu0 0
    %1950 = vmatpush1.bf16.msra.mxu0 %v1932
    %1951 = vmatprep.subr.bf16.mxu0 0
    %1952 = vmatpush1.bf16.msra.mxu0 %v1933
    %1953 = vmatprep.subr.bf16.mxu0 0
    %1954 = vmatpush1.bf16.msra.mxu0 %v1934
    %1955 = vmatprep.subr.bf16.mxu0 0
    %1956 = vmatpush1.bf16.msra.mxu0 %v1935
    %1957 = vmatprep.subr.bf16.mxu0 0
    %1958 = vmatpush1.bf16.msra.mxu0 %v1936
    %1959 = vmatprep.subr.bf16.mxu0 0
    %1960 = vmatpush1.bf16.msra.mxu0 %v1937
    %1961 = vmatprep.subr.bf16.mxu0 0
    %1962 = vmatpush1.bf16.msra.mxu0 %v1938
    %1963 = vmatprep.subr.bf16.mxu0 0
    %1964 = vmatpush1.bf16.msra.mxu0 0
    %1965 = vmatprep.subr.bf16.mxu0 0
    %1966 = vmatpush1.bf16.msra.mxu0 0
    %1967 = vmatprep.subr.bf16.mxu0 0
    %1968 = vmatpush1.bf16.msra.mxu0 0
    %1969 = vmatprep.subr.bf16.mxu0 0
    %1970 = vmatpush1.bf16.msra.mxu0 0
    %1971 = vmatprep.subr.bf16.mxu0 0
    %1972 = vmatpush1.bf16.msra.mxu0 0
    %1973 = vmatprep.subr.bf16.mxu0 0
    %1974 = vmatpush1.bf16.msra.mxu0 0
    %1975 = vmatprep.subr.bf16.mxu0 0
    %1976 = vmatpush1.bf16.msra.mxu0 0
    %1977 = vmatprep.subr.bf16.mxu0 0
    %1978 = vmatpush1.bf16.msra.mxu0 0
    %1979 = vmatprep.mubr.bf16.mxu0 0
    %1980 = vmatmul.mubr.bf16.gmra.mrb[0].mxu0 %v1898
    %v1981 = vpop.f32.mrb[0].mxu0
    %v1982 = vadd.f32 0.0, %v1981
    %v1983 = vpop.f32.mrb[0].mxu0
    %v1984 = vpop.f32.mrb[0].mxu0
    %v1985 = vadd.f32 0.0, %v1984
    %v1986 = vpop.f32.mrb[0].mxu0
    %1987 = vdwg.mxu0
    %v1988 = vpack.c.bf16 %v1985, %v1982
    %v1990 = vlaneseq
    %v1991 = vshrl.u32 %v1990, 7
    %v1992 = vsub.s32 0, %v1991
    %v1993 = vrot.slane %v1897, %v1992
    %1995 = vmatprep.subr.bf16.mxu0 0
    %1996 = vmatpush1.bf16.msra.mxu0 %v1988
    %1997 = vmatprep.subr.bf16.mxu0 0
    %1998 = vmatpush1.bf16.msra.mxu0 0
    %1999 = vmatprep.subr.bf16.mxu0 0
    %2000 = vmatpush1.bf16.msra.mxu0 0
    %2001 = vmatprep.subr.bf16.mxu0 0
    %2002 = vmatpush1.bf16.msra.mxu0 0
    %2003 = vmatprep.subr.bf16.mxu0 0
    %2004 = vmatpush1.bf16.msra.mxu0 0
    %2005 = vmatprep.subr.bf16.mxu0 0
    %2006 = vmatpush1.bf16.msra.mxu0 0
    %2007 = vmatprep.subr.bf16.mxu0 0
    %2008 = vmatpush1.bf16.msra.mxu0 0
    %2009 = vmatprep.subr.bf16.mxu0 0
    %2010 = vmatpush1.bf16.msra.mxu0 0
    %2011 = vmatprep.subr.bf16.mxu0 0
    %2012 = vmatpush1.bf16.msra.mxu0 0
    %2013 = vmatprep.subr.bf16.mxu0 0
    %2014 = vmatpush1.bf16.msra.mxu0 0
    %2015 = vmatprep.subr.bf16.mxu0 0
    %2016 = vmatpush1.bf16.msra.mxu0 0
    %2017 = vmatprep.subr.bf16.mxu0 0
    %2018 = vmatpush1.bf16.msra.mxu0 0
    %2019 = vmatprep.subr.bf16.mxu0 0
    %2020 = vmatpush1.bf16.msra.mxu0 0
    %2021 = vmatprep.subr.bf16.mxu0 0
    %2022 = vmatpush1.bf16.msra.mxu0 0
    %2023 = vmatprep.subr.bf16.mxu0 0
    %2024 = vmatpush1.bf16.msra.mxu0 0
    %2025 = vmatprep.subr.bf16.mxu0 0
    %2026 = vmatpush1.bf16.msra.mxu0 0
    %2027 = vmatprep.mubr.bf16.mxu0 0
    %2028 = vmatmul.mubr.bf16.gmra.mrb[0].mxu0 %v139
    %v2029 = vpop.f32.mrb[0].mxu0
    %v2030 = vadd.f32 %v1993, %v2029
    %v2031 = vpop.f32.mrb[0].mxu0
    %v2032 = vpop.f32.mrb[0].mxu0
    %v2033 = vadd.f32 %v1993, %v2032
    %v2034 = vpop.f32.mrb[0].mxu0
    %2035 = vdwg.mxu0
    %2036 = vadd.xlane.f32.xlu0 %v2030
    %v2037 = vpop.xlane.xlu0 %2036
    %2038 = vadd.xlane.f32.xlu0 %v2033
    %v2039 = vpop.xlane.xlu0 %2038
    %v2040 = vmul.f32 %v2037, 0.03125
    %v2041 = vmul.f32 %v2039, 0.03125
    %v2042 = vmul.f32 %v2030, %v2030
    %v2043 = vmul.f32 %v2033, %v2033
    %2044 = vadd.xlane.f32.xlu0 %v2042
    %v2045 = vpop.xlane.xlu0 %2044
    %2046 = vadd.xlane.f32.xlu0 %v2043
    %v2047 = vpop.xlane.xlu0 %2046
    %v2048 = vmul.f32 %v2045, 0.03125
    %v2049 = vmul.f32 %v2047, 0.03125
    %v2050 = vmul.f32 %v2040, %v2040
    %v2051 = vmul.f32 %v2041, %v2041
    %v2052 = vsub.f32 %v2048, %v2050
    %v2053 = vsub.f32 %v2049, %v2051
    %v2054 = vsub.f32 %v2030, %v2040
    %v2055 = vsub.f32 %v2033, %v2041
    %v2056 = vadd.f32 %v2052, 1e-05
    %v2057 = vadd.f32 %v2053, 1e-05
    %v2058 = vrsqrt.pop %v2056
    %v2059 = vrsqrt.pop %v2057
    %v2060 = vmul.f32 %v2054, %v2058
    %v2061 = vmul.f32 %v2055, %v2059
    %v2062 = vmul.f32 %v2060, %v1706
    %v2063 = vmul.f32 %v2061, %v1706
    %v2064 = vadd.f32 %v2062, %v1714
    %v2065 = vadd.f32 %v2063, %v1714
    %v2066 = vpack.c.bf16 %v2065, %v2064
    %v2067 = vld [vmem:[#allocation8] sm:$0xf]
    %v2068 = vld [vmem:[#allocation8 + $0x4] sm:$0xf]
    %v2069 = vld [vmem:[#allocation8 + $0x8] sm:$0xf]
    %v2070 = vld [vmem:[#allocation8 + $0xc] sm:$0xf]
    %v2071 = vld [vmem:[#allocation8 + $0x10] sm:$0xf]
    %v2072 = vld [vmem:[#allocation8 + $0x14] sm:$0xf]
    %v2073 = vld [vmem:[#allocation8 + $0x18] sm:$0xf]
    %v2074 = vld [vmem:[#allocation8 + $0x1c] sm:$0xf]
    %v2075 = vld [vmem:[#allocation8 + $0x20] sm:$0xf]
    %v2076 = vld [vmem:[#allocation8 + $0x24] sm:$0xf]
    %v2077 = vld [vmem:[#allocation8 + $0x28] sm:$0xf]
    %v2078 = vld [vmem:[#allocation8 + $0x2c] sm:$0xf]
    %v2079 = vld [vmem:[#allocation8 + $0x30] sm:$0xf]
    %v2080 = vld [vmem:[#allocation8 + $0x34] sm:$0xf]
    %v2081 = vld [vmem:[#allocation8 + $0x38] sm:$0xf]
    %v2082 = vld [vmem:[#allocation8 + $0x3c] sm:$0xf]
    %v2083 = vld [vmem:[%s13] sm:$0x1]
    %v2085 = vlaneseq
    %v2086 = vshrl.u32 %v2085, 7
    %v2087 = vsub.s32 0, %v2086
    %v2088 = vrot.slane %v2083, %v2087
    %v2106 = vunpack.c.l.b16 %v2067
    %v2107 = vunpack.c.l.b16 %v2068
    %v2108 = vunpack.c.l.b16 %v2069
    %v2109 = vunpack.c.l.b16 %v2070
    %v2110 = vunpack.c.l.b16 %v2071
    %v2111 = vunpack.c.l.b16 %v2072
    %v2112 = vunpack.c.l.b16 %v2073
    %v2113 = vunpack.c.l.b16 %v2074
    %v2114 = vunpack.c.l.b16 %v2075
    %v2115 = vunpack.c.l.b16 %v2076
    %v2116 = vunpack.c.l.b16 %v2077
    %v2117 = vunpack.c.l.b16 %v2078
    %v2118 = vunpack.c.l.b16 %v2079
    %v2119 = vunpack.c.l.b16 %v2080
    %v2120 = vunpack.c.l.b16 %v2081
    %v2121 = vunpack.c.l.b16 %v2082
    %v2122 = vpack.c.b16 %v2107, %v2106
    %v2123 = vpack.c.b16 %v2109, %v2108
    %v2124 = vpack.c.b16 %v2111, %v2110
    %v2125 = vpack.c.b16 %v2113, %v2112
    %v2126 = vpack.c.b16 %v2115, %v2114
    %v2127 = vpack.c.b16 %v2117, %v2116
    %v2128 = vpack.c.b16 %v2119, %v2118
    %v2129 = vpack.c.b16 %v2121, %v2120
    %2138 = vmatprep.subr.bf16.mxu0 0
    %2139 = vmatpush1.bf16.msra.mxu0 %v2122
    %2140 = vmatprep.subr.bf16.mxu0 0
    %2141 = vmatpush1.bf16.msra.mxu0 %v2123
    %2142 = vmatprep.subr.bf16.mxu0 0
    %2143 = vmatpush1.bf16.msra.mxu0 %v2124
    %2144 = vmatprep.subr.bf16.mxu0 0
    %2145 = vmatpush1.bf16.msra.mxu0 %v2125
    %2146 = vmatprep.subr.bf16.mxu0 0
    %2147 = vmatpush1.bf16.msra.mxu0 %v2126
    %2148 = vmatprep.subr.bf16.mxu0 0
    %2149 = vmatpush1.bf16.msra.mxu0 %v2127
    %2150 = vmatprep.subr.bf16.mxu0 0
    %2151 = vmatpush1.bf16.msra.mxu0 %v2128
    %2152 = vmatprep.subr.bf16.mxu0 0
    %2153 = vmatpush1.bf16.msra.mxu0 %v2129
    %2154 = vmatprep.subr.bf16.mxu0 0
    %2155 = vmatpush1.bf16.msra.mxu0 0
    %2156 = vmatprep.subr.bf16.mxu0 0
    %2157 = vmatpush1.bf16.msra.mxu0 0
    %2158 = vmatprep.subr.bf16.mxu0 0
    %2159 = vmatpush1.bf16.msra.mxu0 0
    %2160 = vmatprep.subr.bf16.mxu0 0
    %2161 = vmatpush1.bf16.msra.mxu0 0
    %2162 = vmatprep.subr.bf16.mxu0 0
    %2163 = vmatpush1.bf16.msra.mxu0 0
    %2164 = vmatprep.subr.bf16.mxu0 0
    %2165 = vmatpush1.bf16.msra.mxu0 0
    %2166 = vmatprep.subr.bf16.mxu0 0
    %2167 = vmatpush1.bf16.msra.mxu0 0
    %2168 = vmatprep.subr.bf16.mxu0 0
    %2169 = vmatpush1.bf16.msra.mxu0 0
    %2170 = vmatprep.mubr.bf16.mxu0 0
    %2171 = vmatmul.mubr.bf16.gmra.mrb[0].mxu0 %v2066
    %v2172 = vpop.f32.mrb[0].mxu0
    %v2173 = vadd.f32 %v2088, %v2172
    %v2174 = vpop.f32.mrb[0].mxu0
    %v2175 = vpop.f32.mrb[0].mxu0
    %v2176 = vadd.f32 %v2088, %v2175
    %v2177 = vpop.f32.mrb[0].mxu0
    %2178 = vdwg.mxu0
    %v2179 = vmax.f32 %v2173, 0.0
    %v2180 = vmax.f32 %v2176, 0.0
    %v2181 = vpack.c.bf16 %v2180, %v2179
    %v2182 = vld [vmem:[#allocation10] sm:$0xf]
    %v2183 = vld [vmem:[#allocation10 + $0x4] sm:$0xf]
    %v2184 = vld [vmem:[#allocation10 + $0x8] sm:$0xf]
    %v2185 = vld [vmem:[#allocation10 + $0xc] sm:$0xf]
    %v2186 = vld [vmem:[#allocation10 + $0x10] sm:$0xf]
    %v2187 = vld [vmem:[#allocation10 + $0x14] sm:$0xf]
    %v2188 = vld [vmem:[#allocation10 + $0x18] sm:$0xf]
    %v2189 = vld [vmem:[#allocation10 + $0x1c] sm:$0xf]
    %v2190 = vld [vmem:[#allocation10 + $0x20] sm:$0xf]
    %v2191 = vld [vmem:[#allocation10 + $0x24] sm:$0xf]
    %v2192 = vld [vmem:[#allocation10 + $0x28] sm:$0xf]
    %v2193 = vld [vmem:[#allocation10 + $0x2c] sm:$0xf]
    %v2194 = vld [vmem:[#allocation10 + $0x30] sm:$0xf]
    %v2195 = vld [vmem:[#allocation10 + $0x34] sm:$0xf]
    %v2196 = vld [vmem:[#allocation10 + $0x38] sm:$0xf]
    %v2197 = vld [vmem:[#allocation10 + $0x3c] sm:$0xf]
    %v2198 = vld [vmem:[%s15] sm:$0x1]
    %v2200 = vlaneseq
    %v2201 = vshrl.u32 %v2200, 7
    %v2202 = vsub.s32 0, %v2201
    %v2203 = vrot.slane %v2198, %v2202
    %v2221 = vunpack.c.l.b16 %v2182
    %v2222 = vunpack.c.l.b16 %v2183
    %v2223 = vunpack.c.l.b16 %v2184
    %v2224 = vunpack.c.l.b16 %v2185
    %v2225 = vunpack.c.l.b16 %v2186
    %v2226 = vunpack.c.l.b16 %v2187
    %v2227 = vunpack.c.l.b16 %v2188
    %v2228 = vunpack.c.l.b16 %v2189
    %v2229 = vunpack.c.l.b16 %v2190
    %v2230 = vunpack.c.l.b16 %v2191
    %v2231 = vunpack.c.l.b16 %v2192
    %v2232 = vunpack.c.l.b16 %v2193
    %v2233 = vunpack.c.l.b16 %v2194
    %v2234 = vunpack.c.l.b16 %v2195
    %v2235 = vunpack.c.l.b16 %v2196
    %v2236 = vunpack.c.l.b16 %v2197
    %v2237 = vpack.c.b16 %v2222, %v2221
    %v2238 = vpack.c.b16 %v2224, %v2223
    %v2239 = vpack.c.b16 %v2226, %v2225
    %v2240 = vpack.c.b16 %v2228, %v2227
    %v2241 = vpack.c.b16 %v2230, %v2229
    %v2242 = vpack.c.b16 %v2232, %v2231
    %v2243 = vpack.c.b16 %v2234, %v2233
    %v2244 = vpack.c.b16 %v2236, %v2235
    %2253 = vmatprep.subr.bf16.mxu0 0
    %2254 = vmatpush1.bf16.msra.mxu0 %v2237
    %2255 = vmatprep.subr.bf16.mxu0 0
    %2256 = vmatpush1.bf16.msra.mxu0 %v2238
    %2257 = vmatprep.subr.bf16.mxu0 0
    %2258 = vmatpush1.bf16.msra.mxu0 %v2239
    %2259 = vmatprep.subr.bf16.mxu0 0
    %2260 = vmatpush1.bf16.msra.mxu0 %v2240
    %2261 = vmatprep.subr.bf16.mxu0 0
    %2262 = vmatpush1.bf16.msra.mxu0 %v2241
    %2263 = vmatprep.subr.bf16.mxu0 0
    %2264 = vmatpush1.bf16.msra.mxu0 %v2242
    %2265 = vmatprep.subr.bf16.mxu0 0
    %2266 = vmatpush1.bf16.msra.mxu0 %v2243
    %2267 = vmatprep.subr.bf16.mxu0 0
    %2268 = vmatpush1.bf16.msra.mxu0 %v2244
    %2269 = vmatprep.subr.bf16.mxu0 0
    %2270 = vmatpush1.bf16.msra.mxu0 0
    %2271 = vmatprep.subr.bf16.mxu0 0
    %2272 = vmatpush1.bf16.msra.mxu0 0
    %2273 = vmatprep.subr.bf16.mxu0 0
    %2274 = vmatpush1.bf16.msra.mxu0 0
    %2275 = vmatprep.subr.bf16.mxu0 0
    %2276 = vmatpush1.bf16.msra.mxu0 0
    %2277 = vmatprep.subr.bf16.mxu0 0
    %2278 = vmatpush1.bf16.msra.mxu0 0
    %2279 = vmatprep.subr.bf16.mxu0 0
    %2280 = vmatpush1.bf16.msra.mxu0 0
    %2281 = vmatprep.subr.bf16.mxu0 0
    %2282 = vmatpush1.bf16.msra.mxu0 0
    %2283 = vmatprep.subr.bf16.mxu0 0
    %2284 = vmatpush1.bf16.msra.mxu0 0
    %2285 = vmatprep.mubr.bf16.mxu0 0
    %2286 = vmatmul.mubr.bf16.gmra.mrb[0].mxu0 %v2181
    %v2287 = vpop.f32.mrb[0].mxu0
    %v2288 = vadd.f32 %v2203, %v2287
    %v2289 = vpop.f32.mrb[0].mxu0
    %v2290 = vpop.f32.mrb[0].mxu0
    %v2291 = vadd.f32 %v2203, %v2290
    %v2292 = vpop.f32.mrb[0].mxu0
    %2293 = vdwg.mxu0
    %2294 = vst [vmem:[#allocation11] sm:$0xff] %v2179
    %2295 = vst [vmem:[#allocation11 + $0x8] sm:$0xff] %v2180
    %2296 = vst [vmem:[%s16] sm:$0xff] %v2288
    %2297 = vst [vmem:[%s16 + $0x8] sm:$0xff] %v2291
    // Predicated region
    $region86: #{hcl_forward.1} parent=1 // pred_check
      _
    $region87: #{hcl_forward.1} parent=1 // pred_check_branch
      %2299 = sbr.rel (0) target = $region89
    $region88: #{hcl_forward.1} parent=1 // pred_region
      _
    $region89: #{hcl_forward.1} parent=1 // pred_fallthru
      _
    // Predicated region
    $region90: #{hcl_forward.1} parent=1 // pred_check
      _
    $region91: #{hcl_forward.1} parent=1 // pred_check_branch
      %2301 = sbr.rel (0) target = $region93
    $region92: #{hcl_forward.1} parent=1 // pred_region
      %s2303 = ssub.s32 256, 256
      %2304 = vsyncadd [#allocation4], %s2303
      %s2305 = sshll.u32 [#allocation11], 4
      %s2306 = int_to_ptr.vmem [resolvable:$true] %s2305
      %2311 = dma.vmem_to_hbm [thread:$0]  %s2306, 256, %s17, [#allocation4], 128, 128, 8
    $region93: #{hcl_forward.1} parent=1 // pred_fallthru
      _
    // Predicated region
    $region94: #{hcl_forward.1} parent=1 // pred_check
      _
    $region95: #{hcl_forward.1} parent=1 // pred_check_branch
      %2313 = sbr.rel (0) target = $region97
    $region96: #{hcl_forward.1} parent=1 // pred_region
      _
    $region97: #{hcl_forward.1} parent=1 // pred_fallthru
      _
    // Predicated region
    $region98: #{hcl_forward.1} parent=1 // pred_check
      _
    $region99: #{hcl_forward.1} parent=1 // pred_check_branch
      %2315 = sbr.rel (0) target = $region101
    $region100: #{hcl_forward.1} parent=1 // pred_region
      %2316 = dma.done [#allocation4], 256
    $region101: #{hcl_forward.1} parent=1 // pred_fallthru
      _
    %2317 = vsyncpa [#allocation3], 1
    %2318 = vsyncpa [#allocation6], 1
    %2319 = vsyncpa [#allocation9], 1
    %2320 = vsyncpa [#allocation4], 1

</llo_original>
